<compile_context>
chip_gen: v7x
topology: tpu7x:2x2x1
jax: 0.10.0
libtpu: 0.0.40
codegen_flags: <defaults>
</compile_context>

<pallas_src>
import jax
import jax.numpy as jnp
from jax.experimental import pallas as pl
from jax.experimental.pallas import tpu as pltpu

SEQ_LEN = 26                 # implied by Linear(69, ...): 3 * (SEQ_LEN - 4 + 1) == 69
EMB = 100                    # word_embedding_dimension
KH = 4                       # conv kernel height
N_POS = SEQ_LEN - KH + 1     # 23
N_FILT = 3
HID = 100
NUM_CLASS = 4                # config.num_class for the demo

EMB_PAD = 128                # lane-pad embedding 100 -> 128
FEAT = N_POS * N_FILT        # 69
FEAT_PAD = 128               # lane-pad 69 -> 128
HID_PAD = 128                # lane-pad 100 -> 128
CLS_PAD = 128                # lane-dense output block, sliced to num_class outside


def _round_up(n, m):
    return ((n + m - 1) // m) * m


# ---------------------------------------------------------------------------
# Kernel: everything is dense 2-D MXU matmuls + a handful of VPU vregs.
# ---------------------------------------------------------------------------
def textcnn_kernel(x_ref, wconv_ref, bconv_ref, w1_ref, b1_ref, w2_ref, b2_ref, out_ref):
    # x_ref    : (TB, 26*128) bf16        wconv_ref: (26*128, 128) bf16
    # bconv_ref: (1, 128)     f32         w1_ref   : (128, 128)    bf16   b1_ref: (1,128) f32
    # w2_ref   : (128, 128)   bf16        b2_ref   : (1, 128)      f32    out_ref: (TB,128) f32
    feat = jnp.dot(x_ref[...], wconv_ref[...],
                   preferred_element_type=jnp.float32)          # conv + interleave (MXU)
    feat = jnp.maximum(feat + bconv_ref[...], 0.0)              # relu(conv + bias), f32 (VPU)
    h = jnp.dot(feat.astype(jnp.bfloat16), w1_ref[...],
                preferred_element_type=jnp.float32) + b1_ref[...]   # Linear(69,100), K padded 128
    out = jnp.dot(h.astype(jnp.bfloat16), w2_ref[...],
                  preferred_element_type=jnp.float32) + b2_ref[...]  # Linear(100,C), N padded 128
    out_ref[...] = out.astype(out_ref.dtype)


# ---------------------------------------------------------------------------
# One-time parameter re-layout (pure glue; mathematically a re-indexing).
# ---------------------------------------------------------------------------
def _prepare_params(params):
    wc = params["wc"].astype(jnp.float32)      # (3, 4, 100)
    bc = params["bc"].astype(jnp.float32)      # (3,)
    W1 = params["W1"].astype(jnp.float32)      # (100, 69)
    b1 = params["b1"].astype(jnp.float32)      # (100,)
    W2 = params["W2"].astype(jnp.float32)      # (C, 100)
    b2 = params["b2"].astype(jnp.float32)      # (C,)
    num_class = W2.shape[0]

    # Wconv[s, d, p*3+k] = wc[k, s-p, d] for 0 <= s-p < KH  (conv + interleaved concat).
    s_idx = jnp.arange(SEQ_LEN)[:, None]
    p_idx = jnp.arange(N_POS)[None, :]
    dh = s_idx - p_idx                                        # (26, 23)
    valid = (dh >= 0) & (dh < KH)
    w_kspd = wc[:, jnp.clip(dh, 0, KH - 1), :]                # (3, 26, 23, 100)
    w_kspd = w_kspd * valid[None, :, :, None]
    w_sdpk = jnp.transpose(w_kspd, (1, 3, 2, 0))              # (26, 100, 23, 3)
    w_sdf = w_sdpk.reshape(SEQ_LEN, EMB, FEAT)                # (26, 100, 69) ; col = p*3+k
    wconv = jnp.zeros((SEQ_LEN, EMB_PAD, FEAT_PAD), jnp.float32)
    wconv = wconv.at[:, :EMB, :FEAT].set(w_sdf)
    wconv = wconv.reshape(SEQ_LEN * EMB_PAD, FEAT_PAD).astype(jnp.bfloat16)

    # Conv bias, laid out to match the interleaved feature columns.
    bconv = jnp.zeros((1, FEAT_PAD), jnp.float32).at[0, :FEAT].set(jnp.tile(bc, N_POS))

    # Linear(69,100) and Linear(100,C), zero-padded to 128x128.
    w1 = jnp.zeros((FEAT_PAD, HID_PAD), jnp.float32).at[:FEAT, :HID].set(W1.T)
    w1 = w1.astype(jnp.bfloat16)
    b1p = jnp.zeros((1, HID_PAD), jnp.float32).at[0, :HID].set(b1)

    w2 = jnp.zeros((HID_PAD, CLS_PAD), jnp.float32).at[:HID, :num_class].set(W2.T)
    w2 = w2.astype(jnp.bfloat16)
    b2p = jnp.zeros((1, CLS_PAD), jnp.float32).at[0, :num_class].set(b2)

    return wconv, bconv, w1, b1p, w2, b2p, num_class


# ---------------------------------------------------------------------------
# Wrapper: batch-blocked grid, weights VMEM-resident, lane-dense output.
# ---------------------------------------------------------------------------
def textcnn_forward(x, x_c, params, *, block_b=512):
    """x: (B, 1, SEQ_LEN, EMB) NCHW float32. x_c accepted but unused (as in the module)."""
    del x_c
    B = x.shape[0]
    wconv, bconv, w1, b1p, w2, b2p, num_class = _prepare_params(params)

    TB = min(block_b, _round_up(B, 16))            # batch tile (multiple of 16 for bf16 sublanes)
    Bp = _round_up(B, TB)

    xs = x[:, 0, :, :].astype(jnp.float32)                                   # (B, 26, 100)
    xp = jnp.pad(xs, ((0, Bp - B), (0, 0), (0, EMB_PAD - EMB)))              # (Bp, 26, 128)
    x2d = xp.reshape(Bp, SEQ_LEN * EMB_PAD).astype(jnp.bfloat16)             # (Bp, 3328) bf16

    K = SEQ_LEN * EMB_PAD
    const = lambda i: (0, 0)

    out = pl.pallas_call(
        textcnn_kernel,
        out_shape=jax.ShapeDtypeStruct((Bp, CLS_PAD), jnp.float32),
        grid=(Bp // TB,),
        in_specs=[
            pl.BlockSpec((TB, K), lambda i: (i, 0)),          # x, batch-blocked & pipelined
            pl.BlockSpec((K, FEAT_PAD), const),               # conv weight (resident)
            pl.BlockSpec((1, FEAT_PAD), const),               # conv bias   (resident)
            pl.BlockSpec((FEAT_PAD, HID_PAD), const),         # W1.T padded (resident)
            pl.BlockSpec((1, HID_PAD), const),                # b1          (resident)
            pl.BlockSpec((HID_PAD, CLS_PAD), const),          # W2.T padded (resident)
            pl.BlockSpec((1, CLS_PAD), const),                # b2          (resident)
        ],
        out_specs=pl.BlockSpec((TB, CLS_PAD), lambda i: (i, 0)),
        compiler_params=pltpu.CompilerParams(
            dimension_semantics=("parallel",)),               # v7x: shard batch across 2 TCs
    )(x2d, wconv, bconv, w1, b1p, w2, b2p)

    return out[:B, :num_class]


# ---------------------------------------------------------------------------
# References.
# ---------------------------------------------------------------------------
def ref_forward(x, params):
    """Pure-JAX f32 reference mirroring the PyTorch forward exactly."""
    B = x.shape[0]
    xs = x[:, 0].astype(jnp.float32)
    wc, bc = params["wc"], params["bc"]
    convs = []
    for k in range(N_FILT):
        acc = jnp.zeros((B, N_POS), jnp.float32)
        for dh in range(KH):
            acc = acc + jnp.einsum("btd,d->bt", xs[:, dh:dh + N_POS, :], wc[k, dh])
        convs.append(jax.nn.relu(acc + bc[k]))
    feat = jnp.stack(convs, axis=-1).reshape(B, N_POS * N_FILT)   # interleaved (B, 69)
    h = feat @ params["W1"].T + params["b1"]
    return h @ params["W2"].T + params["b2"]


def ref_forward_quantized(x, params):
    """Same math, with the bf16 operand quantization the kernel uses (f32 accumulation)."""
    q = lambda a: a.astype(jnp.bfloat16).astype(jnp.float32)
    B = x.shape[0]
    xs = q(x[:, 0])
    wc = q(params["wc"])
    bc = params["bc"].astype(jnp.float32)
    convs = []
    for k in range(N_FILT):
        acc = jnp.zeros((B, N_POS), jnp.float32)
        for dh in range(KH):
            acc = acc + jnp.einsum("btd,d->bt", xs[:, dh:dh + N_POS, :], wc[k, dh])
        convs.append(jax.nn.relu(acc + bc[k]))
    feat = q(jnp.stack(convs, axis=-1).reshape(B, N_POS * N_FILT))
    h = q(feat @ q(params["W1"]).T + params["b1"].astype(jnp.float32))
    return h @ q(params["W2"]).T + params["b2"].astype(jnp.float32)


def init_params(key):
    ks = jax.random.split(key, 6)
    return {
        "wc": 0.1 * jax.random.normal(ks[0], (N_FILT, KH, EMB), jnp.float32),
        "bc": 0.1 * jax.random.normal(ks[1], (N_FILT,), jnp.float32),
        "W1": 0.1 * jax.random.normal(ks[2], (HID, N_POS * N_FILT), jnp.float32),
        "b1": 0.1 * jax.random.normal(ks[3], (HID,), jnp.float32),
        "W2": 0.1 * jax.random.normal(ks[4], (NUM_CLASS, HID), jnp.float32),
        "b2": 0.1 * jax.random.normal(ks[5], (NUM_CLASS,), jnp.float32),
    }


if __name__ == "__main__":
    key = jax.random.PRNGKey(0)
    kx, kc, kp = jax.random.split(key, 3)
    B = 2
    x = jax.random.normal(kx, (B, 1, SEQ_LEN, EMB), jnp.float32)    # NCHW, like PyTorch
    x_c = jax.random.normal(kc, (B, 10), jnp.float32)               # unused by forward
    params = init_params(kp)

    out = jax.block_until_ready(textcnn_forward(x, x_c, params))
    assert out.shape == (B, NUM_CLASS)

    ref_q = ref_forward_quantized(x, params)    # matches kernel's bf16 operand quantization
    ref_f = ref_forward(x, params)              # pure f32 module semantics
    assert jnp.allclose(out, ref_q, atol=5e-3, rtol=5e-3), (out, ref_q)
    assert jnp.allclose(out, ref_f, atol=1e-1, rtol=1e-1), (out, ref_f)
    print("KERNEL_OK")
</pallas_src>

<mosaic_0001>
module attributes {stable_mosaic.version = 11 : i64} {
  func.func @textcnn_kernel(%arg0: i32, %arg1: memref<16x3328xbf16, #tpu.memory_space<vmem>>, %arg2: memref<3328x128xbf16, #tpu.memory_space<vmem>>, %arg3: memref<1x128xf32, #tpu.memory_space<vmem>>, %arg4: memref<128x128xbf16, #tpu.memory_space<vmem>>, %arg5: memref<1x128xf32, #tpu.memory_space<vmem>>, %arg6: memref<128x128xbf16, #tpu.memory_space<vmem>>, %arg7: memref<1x128xf32, #tpu.memory_space<vmem>>, %arg8: memref<16x128xf32, #tpu.memory_space<vmem>>) attributes {dimension_semantics = [#tpu.dimension_semantics<parallel>], iteration_bounds = array<i64: 1>, scalar_prefetch = 0 : i64, scratch_operands = 0 : i64, tpu.core_type = #tpu.core_type<tc>, window_params = [{transform_indices = @transform_0, window_bounds = array<i64: 16, 3328>}, {pipeline_mode = #tpu.pipeline_mode<synchronous>, transform_indices = @transform_1, window_bounds = array<i64: 3328, 128>}, {pipeline_mode = #tpu.pipeline_mode<synchronous>, transform_indices = @transform_2, window_bounds = array<i64: 1, 128>}, {pipeline_mode = #tpu.pipeline_mode<synchronous>, transform_indices = @transform_3, window_bounds = array<i64: 128, 128>}, {pipeline_mode = #tpu.pipeline_mode<synchronous>, transform_indices = @transform_4, window_bounds = array<i64: 1, 128>}, {pipeline_mode = #tpu.pipeline_mode<synchronous>, transform_indices = @transform_5, window_bounds = array<i64: 128, 128>}, {pipeline_mode = #tpu.pipeline_mode<synchronous>, transform_indices = @transform_6, window_bounds = array<i64: 1, 128>}, {transform_indices = @transform_7, window_bounds = array<i64: 16, 128>}]} {
    %c0 = arith.constant 0 : index
    %c0_0 = arith.constant 0 : index
    %0 = vector.load %arg1[%c0, %c0_0] : memref<16x3328xbf16, #tpu.memory_space<vmem>>, vector<16x3328xbf16>
    %c0_1 = arith.constant 0 : index
    %c0_2 = arith.constant 0 : index
    %1 = vector.load %arg2[%c0_1, %c0_2] : memref<3328x128xbf16, #tpu.memory_space<vmem>>, vector<3328x128xbf16>
    %cst = arith.constant dense<0.000000e+00> : vector<16x128xf32>
    %2 = tpu.matmul %0, %1, %cst {dimension_numbers = #tpu.dot_dimension_numbers<[1], [0], [0], [1], [0, 0, 1, 1], [], []>} : vector<16x3328xbf16>, vector<3328x128xbf16>, vector<16x128xf32> -> vector<16x128xf32>
    %c0_3 = arith.constant 0 : index
    %c0_4 = arith.constant 0 : index
    %3 = vector.load %arg3[%c0_3, %c0_4] : memref<1x128xf32, #tpu.memory_space<vmem>>, vector<1x128xf32>
    %4 = vector.broadcast %3 : vector<1x128xf32> to vector<16x128xf32>
    %5 = arith.addf %2, %4 : vector<16x128xf32>
    %cst_5 = arith.constant 0.000000e+00 : f32
    %6 = vector.broadcast %cst_5 : f32 to vector<16x128xf32>
    %7 = arith.maximumf %5, %6 : vector<16x128xf32>
    %8 = arith.truncf %7 : vector<16x128xf32> to vector<16x128xbf16>
    %c0_6 = arith.constant 0 : index
    %c0_7 = arith.constant 0 : index
    %9 = vector.load %arg4[%c0_6, %c0_7] : memref<128x128xbf16, #tpu.memory_space<vmem>>, vector<128x128xbf16>
    %cst_8 = arith.constant dense<0.000000e+00> : vector<16x128xf32>
    %10 = tpu.matmul %8, %9, %cst_8 {dimension_numbers = #tpu.dot_dimension_numbers<[1], [0], [0], [1], [0, 0, 1, 1], [], []>} : vector<16x128xbf16>, vector<128x128xbf16>, vector<16x128xf32> -> vector<16x128xf32>
    %c0_9 = arith.constant 0 : index
    %c0_10 = arith.constant 0 : index
    %11 = vector.load %arg5[%c0_9, %c0_10] : memref<1x128xf32, #tpu.memory_space<vmem>>, vector<1x128xf32>
    %12 = vector.broadcast %11 : vector<1x128xf32> to vector<16x128xf32>
    %13 = arith.addf %10, %12 : vector<16x128xf32>
    %14 = arith.truncf %13 : vector<16x128xf32> to vector<16x128xbf16>
    %c0_11 = arith.constant 0 : index
    %c0_12 = arith.constant 0 : index
    %15 = vector.load %arg6[%c0_11, %c0_12] : memref<128x128xbf16, #tpu.memory_space<vmem>>, vector<128x128xbf16>
    %cst_13 = arith.constant dense<0.000000e+00> : vector<16x128xf32>
    %16 = tpu.matmul %14, %15, %cst_13 {dimension_numbers = #tpu.dot_dimension_numbers<[1], [0], [0], [1], [0, 0, 1, 1], [], []>} : vector<16x128xbf16>, vector<128x128xbf16>, vector<16x128xf32> -> vector<16x128xf32>
    %c0_14 = arith.constant 0 : index
    %c0_15 = arith.constant 0 : index
    %17 = vector.load %arg7[%c0_14, %c0_15] : memref<1x128xf32, #tpu.memory_space<vmem>>, vector<1x128xf32>
    %18 = vector.broadcast %17 : vector<1x128xf32> to vector<16x128xf32>
    %19 = arith.addf %16, %18 : vector<16x128xf32>
    %c0_16 = arith.constant 0 : index
    %c0_17 = arith.constant 0 : index
    %20 = vector.load %arg8[%c0_16, %c0_17] : memref<16x128xf32, #tpu.memory_space<vmem>>, vector<16x128xf32>
    tpu.vector_store %arg8[%c0_16, %c0_17], %19 {strides = array<i32>} : memref<16x128xf32, #tpu.memory_space<vmem>>, vector<16x128xf32>,
    return
  }
  func.func @transform_0(%arg0: i32) -> (i32, i32) {
    %c0_i32 = arith.constant 0 : i32
    %c0_i32_0 = arith.constant 0 : i32
    return %arg0, %c0_i32 : i32, i32
  }
  func.func @transform_1(%arg0: i32) -> (i32, i32) {
    %c0_i32 = arith.constant 0 : i32
    %c0_i32_0 = arith.constant 0 : i32
    %c0_i32_1 = arith.constant 0 : i32
    return %c0_i32, %c0_i32_0 : i32, i32
  }
  func.func @transform_2(%arg0: i32) -> (i32, i32) {
    %c0_i32 = arith.constant 0 : i32
    %c0_i32_0 = arith.constant 0 : i32
    %c0_i32_1 = arith.constant 0 : i32
    return %c0_i32, %c0_i32_0 : i32, i32
  }
  func.func @transform_3(%arg0: i32) -> (i32, i32) {
    %c0_i32 = arith.constant 0 : i32
    %c0_i32_0 = arith.constant 0 : i32
    %c0_i32_1 = arith.constant 0 : i32
    return %c0_i32, %c0_i32_0 : i32, i32
  }
  func.func @transform_4(%arg0: i32) -> (i32, i32) {
    %c0_i32 = arith.constant 0 : i32
    %c0_i32_0 = arith.constant 0 : i32
    %c0_i32_1 = arith.constant 0 : i32
    return %c0_i32, %c0_i32_0 : i32, i32
  }
  func.func @transform_5(%arg0: i32) -> (i32, i32) {
    %c0_i32 = arith.constant 0 : i32
    %c0_i32_0 = arith.constant 0 : i32
    %c0_i32_1 = arith.constant 0 : i32
    return %c0_i32, %c0_i32_0 : i32, i32
  }
  func.func @transform_6(%arg0: i32) -> (i32, i32) {
    %c0_i32 = arith.constant 0 : i32
    %c0_i32_0 = arith.constant 0 : i32
    %c0_i32_1 = arith.constant 0 : i32
    return %c0_i32, %c0_i32_0 : i32, i32
  }
  func.func @transform_7(%arg0: i32) -> (i32, i32) {
    %c0_i32 = arith.constant 0 : i32
    %c0_i32_0 = arith.constant 0 : i32
    return %arg0, %c0_i32 : i32, i32
  }
}

</mosaic_0001>

<llo_original>
// kernel: tpu_custom_call.1
$region0: #{tpu_custom_call.1}
  #allocation0 [shape = 'u32[]', space=smem, size = 0x4, offset = 0x4, fixed_abs, tag = 'smem constant byte address 0x4 - core index']
  #allocation1 [shape = 'u32[144,128]{1,0:T(1,128)}', space=vmem, size = 0x12000, scoped, tag = 'internal scratch']
  %s0 = inlined_call_operand.hbm [shape: bf16[16,3328], index: 0, kind: input, shape index: {}]
  %s1 = inlined_call_operand.hbm [shape: bf16[3328,128], index: 1, kind: input, shape index: {}]
  %s2 = inlined_call_operand.vmem [shape: f32[1,128], index: 2, kind: input, shape index: {}]
  %s3 = inlined_call_operand.hbm [shape: bf16[128,128], index: 3, kind: input, shape index: {}]
  %s4 = inlined_call_operand.vmem [shape: f32[1,128], index: 4, kind: input, shape index: {}]
  %s5 = inlined_call_operand.hbm [shape: bf16[128,128], index: 5, kind: input, shape index: {}]
  %s6 = inlined_call_operand.vmem [shape: f32[1,128], index: 6, kind: input, shape index: {}]
  %s7 = inlined_call_operand.hbm [shape: f32[16,128], index: 7, kind: output, shape index: {}]
  %s8 = sld [smem:[#allocation0]]
  $region54: #{tpu_custom_call.1} parent=0
    _
  %s10 = ssub.s32 1, %s8
  %s11 = scalar_select 0, %s10, %s8
  $region1: #{tpu_custom_call.1} parent=0
    #allocation2 [shape = 'u8[106496]{0}', space=vmem, size = 0x1a000, scoped, tag = 'input window, operand 0, single buffered']
    #allocation3 [shape = 's32[1]{0}', space=sflag, size = 0x4, scoped, tag = 'scoped memory for tpu_custom_call.1']
    #allocation4 [shape = 's32[1]{0}', space=sflag, size = 0x4, scoped, tag = 'scoped memory for tpu_custom_call.1']
    #allocation5 [shape = 'u8[851968]{0}', space=vmem, size = 0xd0000, scoped, tag = 'input window, operand 1, single buffered']
    #allocation6 [shape = 's32[1]{0}', space=sflag, size = 0x4, scoped, tag = 'scoped memory for tpu_custom_call.1']
    #allocation7 [shape = 'u8[32768]{0}', space=vmem, size = 0x8000, scoped, tag = 'input window, operand 3, single buffered']
    #allocation8 [shape = 'u8[32768]{0}', space=vmem, size = 0x8000, scoped, tag = 'input window, operand 5, single buffered']
    #allocation9 [shape = 's32[1]{0}', space=sflag, size = 0x4, scoped, tag = 'scoped memory for tpu_custom_call.1']
    #allocation10 [shape = 'u8[8192]{0}', space=vmem, size = 0x2000, scoped, tag = 'output window, operand 0, single buffered']
    %12 = vsyncpa [#allocation3], 0
    %13 = vsyncpa [#allocation6], 0
    %14 = vsyncpa [#allocation9], 0
    %15 = vsyncpa [#allocation4], 0
    // Predicated region
    $region2: #{tpu_custom_call.1} parent=1 // pred_check
      _
    $region3: #{tpu_custom_call.1} parent=1 // pred_check_branch
      %17 = sbr.rel (0) target = $region5
    $region4: #{tpu_custom_call.1} parent=1 // pred_region
      %s19 = ssub.s32 3328, 3328
      %20 = vsyncadd [#allocation3], %s19
      %s21 = sshll.u32 [#allocation2], 4
      %s22 = int_to_ptr.vmem [resolvable:$true] %s21
      %27 = dma.hbm_to_vmem [thread:$0]  %s0, 3328, %s22, [#allocation3], 1664, 1664, 104
    $region5: #{tpu_custom_call.1} parent=1 // pred_fallthru
      _
    // Predicated region
    $region6: #{tpu_custom_call.1} parent=1 // pred_check
      _
    $region7: #{tpu_custom_call.1} parent=1 // pred_check_branch
      %29 = sbr.rel (0) target = $region9
    $region8: #{tpu_custom_call.1} parent=1 // pred_region
      %s31 = ssub.s32 26624, 26624
      %32 = vsyncadd [#allocation6], %s31
      %s33 = sshll.u32 [#allocation5], 4
      %s34 = int_to_ptr.vmem [resolvable:$true] %s33
      %39 = dma.hbm_to_vmem [thread:$0]  %s1, 26624, %s34, [#allocation6], 64, 64, 4
    $region9: #{tpu_custom_call.1} parent=1 // pred_fallthru
      _
    // Predicated region
    $region10: #{tpu_custom_call.1} parent=1 // pred_check
      _
    $region11: #{tpu_custom_call.1} parent=1 // pred_check_branch
      %41 = sbr.rel (0) target = $region13
    $region12: #{tpu_custom_call.1} parent=1 // pred_region
      _
    $region13: #{tpu_custom_call.1} parent=1 // pred_fallthru
      _
    // Predicated region
    $region14: #{tpu_custom_call.1} parent=1 // pred_check
      _
    $region15: #{tpu_custom_call.1} parent=1 // pred_check_branch
      %43 = sbr.rel (0) target = $region17
    $region16: #{tpu_custom_call.1} parent=1 // pred_region
      %s45 = ssub.s32 1024, 1024
      %46 = vsyncadd [#allocation6], %s45
      %s47 = sshll.u32 [#allocation7], 4
      %s48 = int_to_ptr.vmem [resolvable:$true] %s47
      %53 = dma.hbm_to_vmem [thread:$0]  %s3, 1024, %s48, [#allocation6], 64, 64, 4
    $region17: #{tpu_custom_call.1} parent=1 // pred_fallthru
      _
    // Predicated region
    $region18: #{tpu_custom_call.1} parent=1 // pred_check
      _
    $region19: #{tpu_custom_call.1} parent=1 // pred_check_branch
      %55 = sbr.rel (0) target = $region21
    $region20: #{tpu_custom_call.1} parent=1 // pred_region
      _
    $region21: #{tpu_custom_call.1} parent=1 // pred_fallthru
      _
    // Predicated region
    $region22: #{tpu_custom_call.1} parent=1 // pred_check
      _
    $region23: #{tpu_custom_call.1} parent=1 // pred_check_branch
      %57 = sbr.rel (0) target = $region25
    $region24: #{tpu_custom_call.1} parent=1 // pred_region
      %s59 = ssub.s32 1024, 1024
      %60 = vsyncadd [#allocation9], %s59
      %s61 = sshll.u32 [#allocation8], 4
      %s62 = int_to_ptr.vmem [resolvable:$true] %s61
      %67 = dma.hbm_to_vmem [thread:$0]  %s5, 1024, %s62, [#allocation9], 64, 64, 4
    $region25: #{tpu_custom_call.1} parent=1 // pred_fallthru
      _
    // Predicated region
    $region26: #{tpu_custom_call.1} parent=1 // pred_check
      _
    $region27: #{tpu_custom_call.1} parent=1 // pred_check_branch
      %69 = sbr.rel (0) target = $region29
    $region28: #{tpu_custom_call.1} parent=1 // pred_region
      _
    $region29: #{tpu_custom_call.1} parent=1 // pred_fallthru
      _
    // Predicated region
    $region30: #{tpu_custom_call.1} parent=1 // pred_check
      _
    $region31: #{tpu_custom_call.1} parent=1 // pred_check_branch
      %71 = sbr.rel (0) target = $region33
    $region32: #{tpu_custom_call.1} parent=1 // pred_region
      %72 = dma.done [#allocation3], 3328
    $region33: #{tpu_custom_call.1} parent=1 // pred_fallthru
      _
    // Predicated region
    $region34: #{tpu_custom_call.1} parent=1 // pred_check
      _
    $region35: #{tpu_custom_call.1} parent=1 // pred_check_branch
      %74 = sbr.rel (0) target = $region37
    $region36: #{tpu_custom_call.1} parent=1 // pred_region
      %75 = dma.done [#allocation6], 26624
    $region37: #{tpu_custom_call.1} parent=1 // pred_fallthru
      _
    // Predicated region
    $region38: #{tpu_custom_call.1} parent=1 // pred_check
      _
    $region39: #{tpu_custom_call.1} parent=1 // pred_check_branch
      %77 = sbr.rel (0) target = $region41
    $region40: #{tpu_custom_call.1} parent=1 // pred_region
      %78 = dma.done [#allocation6], 1024
    $region41: #{tpu_custom_call.1} parent=1 // pred_fallthru
      _
    // Predicated region
    $region42: #{tpu_custom_call.1} parent=1 // pred_check
      _
    $region43: #{tpu_custom_call.1} parent=1 // pred_check_branch
      %80 = sbr.rel (0) target = $region45
    $region44: #{tpu_custom_call.1} parent=1 // pred_region
      %81 = dma.done [#allocation9], 1024
    $region45: #{tpu_custom_call.1} parent=1 // pred_fallthru
      _
    %v83 = vld [vmem:[#allocation2] sm:$0xff]
    %v84 = vld [vmem:[#allocation2 + $0x8] sm:$0xff]
    %v85 = vld [vmem:[#allocation2 + $0x10] sm:$0xff]
    %v86 = vld [vmem:[#allocation2 + $0x18] sm:$0xff]
    %v87 = vld [vmem:[#allocation2 + $0x20] sm:$0xff]
    %v88 = vld [vmem:[#allocation2 + $0x28] sm:$0xff]
    %v89 = vld [vmem:[#allocation2 + $0x30] sm:$0xff]
    %v90 = vld [vmem:[#allocation2 + $0x38] sm:$0xff]
    %v91 = vld [vmem:[#allocation2 + $0x40] sm:$0xff]
    %v92 = vld [vmem:[#allocation2 + $0x48] sm:$0xff]
    %v93 = vld [vmem:[#allocation2 + $0x50] sm:$0xff]
    %v94 = vld [vmem:[#allocation2 + $0x58] sm:$0xff]
    %v95 = vld [vmem:[#allocation2 + $0x60] sm:$0xff]
    %v96 = vld [vmem:[#allocation2 + $0x68] sm:$0xff]
    %v97 = vld [vmem:[#allocation2 + $0x70] sm:$0xff]
    %v98 = vld [vmem:[#allocation2 + $0x78] sm:$0xff]
    %v99 = vld [vmem:[#allocation2 + $0x80] sm:$0xff]
    %v100 = vld [vmem:[#allocation2 + $0x88] sm:$0xff]
    %v101 = vld [vmem:[#allocation2 + $0x90] sm:$0xff]
    %v102 = vld [vmem:[#allocation2 + $0x98] sm:$0xff]
    %v103 = vld [vmem:[#allocation2 + $0xa0] sm:$0xff]
    %v104 = vld [vmem:[#allocation2 + $0xa8] sm:$0xff]
    %v105 = vld [vmem:[#allocation2 + $0xb0] sm:$0xff]
    %v106 = vld [vmem:[#allocation2 + $0xb8] sm:$0xff]
    %v107 = vld [vmem:[#allocation2 + $0xc0] sm:$0xff]
    %v108 = vld [vmem:[#allocation2 + $0xc8] sm:$0xff]
    %v109 = vld [vmem:[#allocation5] sm:$0xf]
    %v110 = vld [vmem:[#allocation5 + $0x4] sm:$0xf]
    %v111 = vld [vmem:[#allocation5 + $0x8] sm:$0xf]
    %v112 = vld [vmem:[#allocation5 + $0xc] sm:$0xf]
    %v113 = vld [vmem:[#allocation5 + $0x10] sm:$0xf]
    %v114 = vld [vmem:[#allocation5 + $0x14] sm:$0xf]
    %v115 = vld [vmem:[#allocation5 + $0x18] sm:$0xf]
    %v116 = vld [vmem:[#allocation5 + $0x1c] sm:$0xf]
    %v117 = vld [vmem:[#allocation5 + $0x20] sm:$0xf]
    %v118 = vld [vmem:[#allocation5 + $0x24] sm:$0xf]
    %v119 = vld [vmem:[#allocation5 + $0x28] sm:$0xf]
    %v120 = vld [vmem:[#allocation5 + $0x2c] sm:$0xf]
    %v121 = vld [vmem:[#allocation5 + $0x30] sm:$0xf]
    %v122 = vld [vmem:[#allocation5 + $0x34] sm:$0xf]
    %v123 = vld [vmem:[#allocation5 + $0x38] sm:$0xf]
    %v124 = vld [vmem:[#allocation5 + $0x3c] sm:$0xf]
    %v125 = vld [vmem:[#allocation5 + $0x40] sm:$0xf]
    %v126 = vld [vmem:[#allocation5 + $0x44] sm:$0xf]
    %v127 = vld [vmem:[#allocation5 + $0x48] sm:$0xf]
    %v128 = vld [vmem:[#allocation5 + $0x4c] sm:$0xf]
    %v129 = vld [vmem:[#allocation5 + $0x50] sm:$0xf]
    %v130 = vld [vmem:[#allocation5 + $0x54] sm:$0xf]
    %v131 = vld [vmem:[#allocation5 + $0x58] sm:$0xf]
    %v132 = vld [vmem:[#allocation5 + $0x5c] sm:$0xf]
    %v133 = vld [vmem:[#allocation5 + $0x60] sm:$0xf]
    %v134 = vld [vmem:[#allocation5 + $0x64] sm:$0xf]
    %v135 = vld [vmem:[#allocation5 + $0x68] sm:$0xf]
    %v136 = vld [vmem:[#allocation5 + $0x6c] sm:$0xf]
    %v137 = vld [vmem:[#allocation5 + $0x70] sm:$0xf]
    %v138 = vld [vmem:[#allocation5 + $0x74] sm:$0xf]
    %v139 = vld [vmem:[#allocation5 + $0x78] sm:$0xf]
    %v140 = vld [vmem:[#allocation5 + $0x7c] sm:$0xf]
    %v141 = vld [vmem:[#allocation5 + $0x80] sm:$0xf]
    %v142 = vld [vmem:[#allocation5 + $0x84] sm:$0xf]
    %v143 = vld [vmem:[#allocation5 + $0x88] sm:$0xf]
    %v144 = vld [vmem:[#allocation5 + $0x8c] sm:$0xf]
    %v145 = vld [vmem:[#allocation5 + $0x90] sm:$0xf]
    %v146 = vld [vmem:[#allocation5 + $0x94] sm:$0xf]
    %v147 = vld [vmem:[#allocation5 + $0x98] sm:$0xf]
    %v148 = vld [vmem:[#allocation5 + $0x9c] sm:$0xf]
    %v149 = vld [vmem:[#allocation5 + $0xa0] sm:$0xf]
    %v150 = vld [vmem:[#allocation5 + $0xa4] sm:$0xf]
    %v151 = vld [vmem:[#allocation5 + $0xa8] sm:$0xf]
    %v152 = vld [vmem:[#allocation5 + $0xac] sm:$0xf]
    %v153 = vld [vmem:[#allocation5 + $0xb0] sm:$0xf]
    %v154 = vld [vmem:[#allocation5 + $0xb4] sm:$0xf]
    %v155 = vld [vmem:[#allocation5 + $0xb8] sm:$0xf]
    %v156 = vld [vmem:[#allocation5 + $0xbc] sm:$0xf]
    %v157 = vld [vmem:[#allocation5 + $0xc0] sm:$0xf]
    %v158 = vld [vmem:[#allocation5 + $0xc4] sm:$0xf]
    %v159 = vld [vmem:[#allocation5 + $0xc8] sm:$0xf]
    %v160 = vld [vmem:[#allocation5 + $0xcc] sm:$0xf]
    %v161 = vld [vmem:[#allocation5 + $0xd0] sm:$0xf]
    %v162 = vld [vmem:[#allocation5 + $0xd4] sm:$0xf]
    %v163 = vld [vmem:[#allocation5 + $0xd8] sm:$0xf]
    %v164 = vld [vmem:[#allocation5 + $0xdc] sm:$0xf]
    %v165 = vld [vmem:[#allocation5 + $0xe0] sm:$0xf]
    %v166 = vld [vmem:[#allocation5 + $0xe4] sm:$0xf]
    %v167 = vld [vmem:[#allocation5 + $0xe8] sm:$0xf]
    %v168 = vld [vmem:[#allocation5 + $0xec] sm:$0xf]
    %v169 = vld [vmem:[#allocation5 + $0xf0] sm:$0xf]
    %v170 = vld [vmem:[#allocation5 + $0xf4] sm:$0xf]
    %v171 = vld [vmem:[#allocation5 + $0xf8] sm:$0xf]
    %v172 = vld [vmem:[#allocation5 + $0xfc] sm:$0xf]
    %v173 = vld [vmem:[#allocation5 + $0x100] sm:$0xf]
    %v174 = vld [vmem:[#allocation5 + $0x104] sm:$0xf]
    %v175 = vld [vmem:[#allocation5 + $0x108] sm:$0xf]
    %v176 = vld [vmem:[#allocation5 + $0x10c] sm:$0xf]
    %v177 = vld [vmem:[#allocation5 + $0x110] sm:$0xf]
    %v178 = vld [vmem:[#allocation5 + $0x114] sm:$0xf]
    %v179 = vld [vmem:[#allocation5 + $0x118] sm:$0xf]
    %v180 = vld [vmem:[#allocation5 + $0x11c] sm:$0xf]
    %v181 = vld [vmem:[#allocation5 + $0x120] sm:$0xf]
    %v182 = vld [vmem:[#allocation5 + $0x124] sm:$0xf]
    %v183 = vld [vmem:[#allocation5 + $0x128] sm:$0xf]
    %v184 = vld [vmem:[#allocation5 + $0x12c] sm:$0xf]
    %v185 = vld [vmem:[#allocation5 + $0x130] sm:$0xf]
    %v186 = vld [vmem:[#allocation5 + $0x134] sm:$0xf]
    %v187 = vld [vmem:[#allocation5 + $0x138] sm:$0xf]
    %v188 = vld [vmem:[#allocation5 + $0x13c] sm:$0xf]
    %v189 = vld [vmem:[#allocation5 + $0x140] sm:$0xf]
    %v190 = vld [vmem:[#allocation5 + $0x144] sm:$0xf]
    %v191 = vld [vmem:[#allocation5 + $0x148] sm:$0xf]
    %v192 = vld [vmem:[#allocation5 + $0x14c] sm:$0xf]
    %v193 = vld [vmem:[#allocation5 + $0x150] sm:$0xf]
    %v194 = vld [vmem:[#allocation5 + $0x154] sm:$0xf]
    %v195 = vld [vmem:[#allocation5 + $0x158] sm:$0xf]
    %v196 = vld [vmem:[#allocation5 + $0x15c] sm:$0xf]
    %v197 = vld [vmem:[#allocation5 + $0x160] sm:$0xf]
    %v198 = vld [vmem:[#allocation5 + $0x164] sm:$0xf]
    %v199 = vld [vmem:[#allocation5 + $0x168] sm:$0xf]
    %v200 = vld [vmem:[#allocation5 + $0x16c] sm:$0xf]
    %v201 = vld [vmem:[#allocation5 + $0x170] sm:$0xf]
    %v202 = vld [vmem:[#allocation5 + $0x174] sm:$0xf]
    %v203 = vld [vmem:[#allocation5 + $0x178] sm:$0xf]
    %v204 = vld [vmem:[#allocation5 + $0x17c] sm:$0xf]
    %v205 = vld [vmem:[#allocation5 + $0x180] sm:$0xf]
    %v206 = vld [vmem:[#allocation5 + $0x184] sm:$0xf]
    %v207 = vld [vmem:[#allocation5 + $0x188] sm:$0xf]
    %v208 = vld [vmem:[#allocation5 + $0x18c] sm:$0xf]
    %v209 = vld [vmem:[#allocation5 + $0x190] sm:$0xf]
    %v210 = vld [vmem:[#allocation5 + $0x194] sm:$0xf]
    %v211 = vld [vmem:[#allocation5 + $0x198] sm:$0xf]
    %v212 = vld [vmem:[#allocation5 + $0x19c] sm:$0xf]
    %v213 = vld [vmem:[#allocation5 + $0x1a0] sm:$0xf]
    %v214 = vld [vmem:[#allocation5 + $0x1a4] sm:$0xf]
    %v215 = vld [vmem:[#allocation5 + $0x1a8] sm:$0xf]
    %v216 = vld [vmem:[#allocation5 + $0x1ac] sm:$0xf]
    %v217 = vld [vmem:[#allocation5 + $0x1b0] sm:$0xf]
    %v218 = vld [vmem:[#allocation5 + $0x1b4] sm:$0xf]
    %v219 = vld [vmem:[#allocation5 + $0x1b8] sm:$0xf]
    %v220 = vld [vmem:[#allocation5 + $0x1bc] sm:$0xf]
    %v221 = vld [vmem:[#allocation5 + $0x1c0] sm:$0xf]
    %v222 = vld [vmem:[#allocation5 + $0x1c4] sm:$0xf]
    %v223 = vld [vmem:[#allocation5 + $0x1c8] sm:$0xf]
    %v224 = vld [vmem:[#allocation5 + $0x1cc] sm:$0xf]
    %v225 = vld [vmem:[#allocation5 + $0x1d0] sm:$0xf]
    %v226 = vld [vmem:[#allocation5 + $0x1d4] sm:$0xf]
    %v227 = vld [vmem:[#allocation5 + $0x1d8] sm:$0xf]
    %v228 = vld [vmem:[#allocation5 + $0x1dc] sm:$0xf]
    %v229 = vld [vmem:[#allocation5 + $0x1e0] sm:$0xf]
    %v230 = vld [vmem:[#allocation5 + $0x1e4] sm:$0xf]
    %v231 = vld [vmem:[#allocation5 + $0x1e8] sm:$0xf]
    %v232 = vld [vmem:[#allocation5 + $0x1ec] sm:$0xf]
    %v233 = vld [vmem:[#allocation5 + $0x1f0] sm:$0xf]
    %v234 = vld [vmem:[#allocation5 + $0x1f4] sm:$0xf]
    %v235 = vld [vmem:[#allocation5 + $0x1f8] sm:$0xf]
    %v236 = vld [vmem:[#allocation5 + $0x1fc] sm:$0xf]
    %v237 = vld [vmem:[#allocation5 + $0x200] sm:$0xf]
    %v238 = vld [vmem:[#allocation5 + $0x204] sm:$0xf]
    %v239 = vld [vmem:[#allocation5 + $0x208] sm:$0xf]
    %v240 = vld [vmem:[#allocation5 + $0x20c] sm:$0xf]
    %v241 = vld [vmem:[#allocation5 + $0x210] sm:$0xf]
    %v242 = vld [vmem:[#allocation5 + $0x214] sm:$0xf]
    %v243 = vld [vmem:[#allocation5 + $0x218] sm:$0xf]
    %v244 = vld [vmem:[#allocation5 + $0x21c] sm:$0xf]
    %v245 = vld [vmem:[#allocation5 + $0x220] sm:$0xf]
    %v246 = vld [vmem:[#allocation5 + $0x224] sm:$0xf]
    %v247 = vld [vmem:[#allocation5 + $0x228] sm:$0xf]
    %v248 = vld [vmem:[#allocation5 + $0x22c] sm:$0xf]
    %v249 = vld [vmem:[#allocation5 + $0x230] sm:$0xf]
    %v250 = vld [vmem:[#allocation5 + $0x234] sm:$0xf]
    %v251 = vld [vmem:[#allocation5 + $0x238] sm:$0xf]
    %v252 = vld [vmem:[#allocation5 + $0x23c] sm:$0xf]
    %v253 = vld [vmem:[#allocation5 + $0x240] sm:$0xf]
    %v254 = vld [vmem:[#allocation5 + $0x244] sm:$0xf]
    %v255 = vld [vmem:[#allocation5 + $0x248] sm:$0xf]
    %v256 = vld [vmem:[#allocation5 + $0x24c] sm:$0xf]
    %v257 = vld [vmem:[#allocation5 + $0x250] sm:$0xf]
    %v258 = vld [vmem:[#allocation5 + $0x254] sm:$0xf]
    %v259 = vld [vmem:[#allocation5 + $0x258] sm:$0xf]
    %v260 = vld [vmem:[#allocation5 + $0x25c] sm:$0xf]
    %v261 = vld [vmem:[#allocation5 + $0x260] sm:$0xf]
    %v262 = vld [vmem:[#allocation5 + $0x264] sm:$0xf]
    %v263 = vld [vmem:[#allocation5 + $0x268] sm:$0xf]
    %v264 = vld [vmem:[#allocation5 + $0x26c] sm:$0xf]
    %v265 = vld [vmem:[#allocation5 + $0x270] sm:$0xf]
    %v266 = vld [vmem:[#allocation5 + $0x274] sm:$0xf]
    %v267 = vld [vmem:[#allocation5 + $0x278] sm:$0xf]
    %v268 = vld [vmem:[#allocation5 + $0x27c] sm:$0xf]
    %v269 = vld [vmem:[#allocation5 + $0x280] sm:$0xf]
    %v270 = vld [vmem:[#allocation5 + $0x284] sm:$0xf]
    %v271 = vld [vmem:[#allocation5 + $0x288] sm:$0xf]
    %v272 = vld [vmem:[#allocation5 + $0x28c] sm:$0xf]
    %v273 = vld [vmem:[#allocation5 + $0x290] sm:$0xf]
    %v274 = vld [vmem:[#allocation5 + $0x294] sm:$0xf]
    %v275 = vld [vmem:[#allocation5 + $0x298] sm:$0xf]
    %v276 = vld [vmem:[#allocation5 + $0x29c] sm:$0xf]
    %v277 = vld [vmem:[#allocation5 + $0x2a0] sm:$0xf]
    %v278 = vld [vmem:[#allocation5 + $0x2a4] sm:$0xf]
    %v279 = vld [vmem:[#allocation5 + $0x2a8] sm:$0xf]
    %v280 = vld [vmem:[#allocation5 + $0x2ac] sm:$0xf]
    %v281 = vld [vmem:[#allocation5 + $0x2b0] sm:$0xf]
    %v282 = vld [vmem:[#allocation5 + $0x2b4] sm:$0xf]
    %v283 = vld [vmem:[#allocation5 + $0x2b8] sm:$0xf]
    %v284 = vld [vmem:[#allocation5 + $0x2bc] sm:$0xf]
    %v285 = vld [vmem:[#allocation5 + $0x2c0] sm:$0xf]
    %v286 = vld [vmem:[#allocation5 + $0x2c4] sm:$0xf]
    %v287 = vld [vmem:[#allocation5 + $0x2c8] sm:$0xf]
    %v288 = vld [vmem:[#allocation5 + $0x2cc] sm:$0xf]
    %v289 = vld [vmem:[#allocation5 + $0x2d0] sm:$0xf]
    %v290 = vld [vmem:[#allocation5 + $0x2d4] sm:$0xf]
    %v291 = vld [vmem:[#allocation5 + $0x2d8] sm:$0xf]
    %v292 = vld [vmem:[#allocation5 + $0x2dc] sm:$0xf]
    %v293 = vld [vmem:[#allocation5 + $0x2e0] sm:$0xf]
    %v294 = vld [vmem:[#allocation5 + $0x2e4] sm:$0xf]
    %v295 = vld [vmem:[#allocation5 + $0x2e8] sm:$0xf]
    %v296 = vld [vmem:[#allocation5 + $0x2ec] sm:$0xf]
    %v297 = vld [vmem:[#allocation5 + $0x2f0] sm:$0xf]
    %v298 = vld [vmem:[#allocation5 + $0x2f4] sm:$0xf]
    %v299 = vld [vmem:[#allocation5 + $0x2f8] sm:$0xf]
    %v300 = vld [vmem:[#allocation5 + $0x2fc] sm:$0xf]
    %v301 = vld [vmem:[#allocation5 + $0x300] sm:$0xf]
    %v302 = vld [vmem:[#allocation5 + $0x304] sm:$0xf]
    %v303 = vld [vmem:[#allocation5 + $0x308] sm:$0xf]
    %v304 = vld [vmem:[#allocation5 + $0x30c] sm:$0xf]
    %v305 = vld [vmem:[#allocation5 + $0x310] sm:$0xf]
    %v306 = vld [vmem:[#allocation5 + $0x314] sm:$0xf]
    %v307 = vld [vmem:[#allocation5 + $0x318] sm:$0xf]
    %v308 = vld [vmem:[#allocation5 + $0x31c] sm:$0xf]
    %v309 = vld [vmem:[#allocation5 + $0x320] sm:$0xf]
    %v310 = vld [vmem:[#allocation5 + $0x324] sm:$0xf]
    %v311 = vld [vmem:[#allocation5 + $0x328] sm:$0xf]
    %v312 = vld [vmem:[#allocation5 + $0x32c] sm:$0xf]
    %v313 = vld [vmem:[#allocation5 + $0x330] sm:$0xf]
    %v314 = vld [vmem:[#allocation5 + $0x334] sm:$0xf]
    %v315 = vld [vmem:[#allocation5 + $0x338] sm:$0xf]
    %v316 = vld [vmem:[#allocation5 + $0x33c] sm:$0xf]
    %v317 = vld [vmem:[#allocation5 + $0x340] sm:$0xf]
    %v318 = vld [vmem:[#allocation5 + $0x344] sm:$0xf]
    %v319 = vld [vmem:[#allocation5 + $0x348] sm:$0xf]
    %v320 = vld [vmem:[#allocation5 + $0x34c] sm:$0xf]
    %v321 = vld [vmem:[#allocation5 + $0x350] sm:$0xf]
    %v322 = vld [vmem:[#allocation5 + $0x354] sm:$0xf]
    %v323 = vld [vmem:[#allocation5 + $0x358] sm:$0xf]
    %v324 = vld [vmem:[#allocation5 + $0x35c] sm:$0xf]
    %v325 = vld [vmem:[#allocation5 + $0x360] sm:$0xf]
    %v326 = vld [vmem:[#allocation5 + $0x364] sm:$0xf]
    %v327 = vld [vmem:[#allocation5 + $0x368] sm:$0xf]
    %v328 = vld [vmem:[#allocation5 + $0x36c] sm:$0xf]
    %v329 = vld [vmem:[#allocation5 + $0x370] sm:$0xf]
    %v330 = vld [vmem:[#allocation5 + $0x374] sm:$0xf]
    %v331 = vld [vmem:[#allocation5 + $0x378] sm:$0xf]
    %v332 = vld [vmem:[#allocation5 + $0x37c] sm:$0xf]
    %v333 = vld [vmem:[#allocation5 + $0x380] sm:$0xf]
    %v334 = vld [vmem:[#allocation5 + $0x384] sm:$0xf]
    %v335 = vld [vmem:[#allocation5 + $0x388] sm:$0xf]
    %v336 = vld [vmem:[#allocation5 + $0x38c] sm:$0xf]
    %v337 = vld [vmem:[#allocation5 + $0x390] sm:$0xf]
    %v338 = vld [vmem:[#allocation5 + $0x394] sm:$0xf]
    %v339 = vld [vmem:[#allocation5 + $0x398] sm:$0xf]
    %v340 = vld [vmem:[#allocation5 + $0x39c] sm:$0xf]
    %v341 = vld [vmem:[#allocation5 + $0x3a0] sm:$0xf]
    %v342 = vld [vmem:[#allocation5 + $0x3a4] sm:$0xf]
    %v343 = vld [vmem:[#allocation5 + $0x3a8] sm:$0xf]
    %v344 = vld [vmem:[#allocation5 + $0x3ac] sm:$0xf]
    %v345 = vld [vmem:[#allocation5 + $0x3b0] sm:$0xf]
    %v346 = vld [vmem:[#allocation5 + $0x3b4] sm:$0xf]
    %v347 = vld [vmem:[#allocation5 + $0x3b8] sm:$0xf]
    %v348 = vld [vmem:[#allocation5 + $0x3bc] sm:$0xf]
    %v349 = vld [vmem:[#allocation5 + $0x3c0] sm:$0xf]
    %v350 = vld [vmem:[#allocation5 + $0x3c4] sm:$0xf]
    %v351 = vld [vmem:[#allocation5 + $0x3c8] sm:$0xf]
    %v352 = vld [vmem:[#allocation5 + $0x3cc] sm:$0xf]
    %v353 = vld [vmem:[#allocation5 + $0x3d0] sm:$0xf]
    %v354 = vld [vmem:[#allocation5 + $0x3d4] sm:$0xf]
    %v355 = vld [vmem:[#allocation5 + $0x3d8] sm:$0xf]
    %v356 = vld [vmem:[#allocation5 + $0x3dc] sm:$0xf]
    %v357 = vld [vmem:[#allocation5 + $0x3e0] sm:$0xf]
    %v358 = vld [vmem:[#allocation5 + $0x3e4] sm:$0xf]
    %v359 = vld [vmem:[#allocation5 + $0x3e8] sm:$0xf]
    %v360 = vld [vmem:[#allocation5 + $0x3ec] sm:$0xf]
    %v361 = vld [vmem:[#allocation5 + $0x3f0] sm:$0xf]
    %v362 = vld [vmem:[#allocation5 + $0x3f4] sm:$0xf]
    %v363 = vld [vmem:[#allocation5 + $0x3f8] sm:$0xf]
    %v364 = vld [vmem:[#allocation5 + $0x3fc] sm:$0xf]
    %v365 = vld [vmem:[#allocation5 + $0x400] sm:$0xf]
    %v366 = vld [vmem:[#allocation5 + $0x404] sm:$0xf]
    %v367 = vld [vmem:[#allocation5 + $0x408] sm:$0xf]
    %v368 = vld [vmem:[#allocation5 + $0x40c] sm:$0xf]
    %v369 = vld [vmem:[#allocation5 + $0x410] sm:$0xf]
    %v370 = vld [vmem:[#allocation5 + $0x414] sm:$0xf]
    %v371 = vld [vmem:[#allocation5 + $0x418] sm:$0xf]
    %v372 = vld [vmem:[#allocation5 + $0x41c] sm:$0xf]
    %v373 = vld [vmem:[#allocation5 + $0x420] sm:$0xf]
    %v374 = vld [vmem:[#allocation5 + $0x424] sm:$0xf]
    %v375 = vld [vmem:[#allocation5 + $0x428] sm:$0xf]
    %v376 = vld [vmem:[#allocation5 + $0x42c] sm:$0xf]
    %v377 = vld [vmem:[#allocation5 + $0x430] sm:$0xf]
    %v378 = vld [vmem:[#allocation5 + $0x434] sm:$0xf]
    %v379 = vld [vmem:[#allocation5 + $0x438] sm:$0xf]
    %v380 = vld [vmem:[#allocation5 + $0x43c] sm:$0xf]
    %v381 = vld [vmem:[#allocation5 + $0x440] sm:$0xf]
    %v382 = vld [vmem:[#allocation5 + $0x444] sm:$0xf]
    %v383 = vld [vmem:[#allocation5 + $0x448] sm:$0xf]
    %v384 = vld [vmem:[#allocation5 + $0x44c] sm:$0xf]
    %v385 = vld [vmem:[#allocation5 + $0x450] sm:$0xf]
    %v386 = vld [vmem:[#allocation5 + $0x454] sm:$0xf]
    %v387 = vld [vmem:[#allocation5 + $0x458] sm:$0xf]
    %v388 = vld [vmem:[#allocation5 + $0x45c] sm:$0xf]
    %v389 = vld [vmem:[#allocation5 + $0x460] sm:$0xf]
    %v390 = vld [vmem:[#allocation5 + $0x464] sm:$0xf]
    %v391 = vld [vmem:[#allocation5 + $0x468] sm:$0xf]
    %v392 = vld [vmem:[#allocation5 + $0x46c] sm:$0xf]
    %v393 = vld [vmem:[#allocation5 + $0x470] sm:$0xf]
    %v394 = vld [vmem:[#allocation5 + $0x474] sm:$0xf]
    %v395 = vld [vmem:[#allocation5 + $0x478] sm:$0xf]
    %v396 = vld [vmem:[#allocation5 + $0x47c] sm:$0xf]
    %v397 = vld [vmem:[#allocation5 + $0x480] sm:$0xf]
    %v398 = vld [vmem:[#allocation5 + $0x484] sm:$0xf]
    %v399 = vld [vmem:[#allocation5 + $0x488] sm:$0xf]
    %v400 = vld [vmem:[#allocation5 + $0x48c] sm:$0xf]
    %v401 = vld [vmem:[#allocation5 + $0x490] sm:$0xf]
    %v402 = vld [vmem:[#allocation5 + $0x494] sm:$0xf]
    %v403 = vld [vmem:[#allocation5 + $0x498] sm:$0xf]
    %v404 = vld [vmem:[#allocation5 + $0x49c] sm:$0xf]
    %v405 = vld [vmem:[#allocation5 + $0x4a0] sm:$0xf]
    %v406 = vld [vmem:[#allocation5 + $0x4a4] sm:$0xf]
    %v407 = vld [vmem:[#allocation5 + $0x4a8] sm:$0xf]
    %v408 = vld [vmem:[#allocation5 + $0x4ac] sm:$0xf]
    %v409 = vld [vmem:[#allocation5 + $0x4b0] sm:$0xf]
    %v410 = vld [vmem:[#allocation5 + $0x4b4] sm:$0xf]
    %v411 = vld [vmem:[#allocation5 + $0x4b8] sm:$0xf]
    %v412 = vld [vmem:[#allocation5 + $0x4bc] sm:$0xf]
    %v413 = vld [vmem:[#allocation5 + $0x4c0] sm:$0xf]
    %v414 = vld [vmem:[#allocation5 + $0x4c4] sm:$0xf]
    %v415 = vld [vmem:[#allocation5 + $0x4c8] sm:$0xf]
    %v416 = vld [vmem:[#allocation5 + $0x4cc] sm:$0xf]
    %v417 = vld [vmem:[#allocation5 + $0x4d0] sm:$0xf]
    %v418 = vld [vmem:[#allocation5 + $0x4d4] sm:$0xf]
    %v419 = vld [vmem:[#allocation5 + $0x4d8] sm:$0xf]
    %v420 = vld [vmem:[#allocation5 + $0x4dc] sm:$0xf]
    %v421 = vld [vmem:[#allocation5 + $0x4e0] sm:$0xf]
    %v422 = vld [vmem:[#allocation5 + $0x4e4] sm:$0xf]
    %v423 = vld [vmem:[#allocation5 + $0x4e8] sm:$0xf]
    %v424 = vld [vmem:[#allocation5 + $0x4ec] sm:$0xf]
    %v425 = vld [vmem:[#allocation5 + $0x4f0] sm:$0xf]
    %v426 = vld [vmem:[#allocation5 + $0x4f4] sm:$0xf]
    %v427 = vld [vmem:[#allocation5 + $0x4f8] sm:$0xf]
    %v428 = vld [vmem:[#allocation5 + $0x4fc] sm:$0xf]
    %v429 = vld [vmem:[#allocation5 + $0x500] sm:$0xf]
    %v430 = vld [vmem:[#allocation5 + $0x504] sm:$0xf]
    %v431 = vld [vmem:[#allocation5 + $0x508] sm:$0xf]
    %v432 = vld [vmem:[#allocation5 + $0x50c] sm:$0xf]
    %v433 = vld [vmem:[#allocation5 + $0x510] sm:$0xf]
    %v434 = vld [vmem:[#allocation5 + $0x514] sm:$0xf]
    %v435 = vld [vmem:[#allocation5 + $0x518] sm:$0xf]
    %v436 = vld [vmem:[#allocation5 + $0x51c] sm:$0xf]
    %v437 = vld [vmem:[#allocation5 + $0x520] sm:$0xf]
    %v438 = vld [vmem:[#allocation5 + $0x524] sm:$0xf]
    %v439 = vld [vmem:[#allocation5 + $0x528] sm:$0xf]
    %v440 = vld [vmem:[#allocation5 + $0x52c] sm:$0xf]
    %v441 = vld [vmem:[#allocation5 + $0x530] sm:$0xf]
    %v442 = vld [vmem:[#allocation5 + $0x534] sm:$0xf]
    %v443 = vld [vmem:[#allocation5 + $0x538] sm:$0xf]
    %v444 = vld [vmem:[#allocation5 + $0x53c] sm:$0xf]
    %v445 = vld [vmem:[#allocation5 + $0x540] sm:$0xf]
    %v446 = vld [vmem:[#allocation5 + $0x544] sm:$0xf]
    %v447 = vld [vmem:[#allocation5 + $0x548] sm:$0xf]
    %v448 = vld [vmem:[#allocation5 + $0x54c] sm:$0xf]
    %v449 = vld [vmem:[#allocation5 + $0x550] sm:$0xf]
    %v450 = vld [vmem:[#allocation5 + $0x554] sm:$0xf]
    %v451 = vld [vmem:[#allocation5 + $0x558] sm:$0xf]
    %v452 = vld [vmem:[#allocation5 + $0x55c] sm:$0xf]
    %v453 = vld [vmem:[#allocation5 + $0x560] sm:$0xf]
    %v454 = vld [vmem:[#allocation5 + $0x564] sm:$0xf]
    %v455 = vld [vmem:[#allocation5 + $0x568] sm:$0xf]
    %v456 = vld [vmem:[#allocation5 + $0x56c] sm:$0xf]
    %v457 = vld [vmem:[#allocation5 + $0x570] sm:$0xf]
    %v458 = vld [vmem:[#allocation5 + $0x574] sm:$0xf]
    %v459 = vld [vmem:[#allocation5 + $0x578] sm:$0xf]
    %v460 = vld [vmem:[#allocation5 + $0x57c] sm:$0xf]
    %v461 = vld [vmem:[#allocation5 + $0x580] sm:$0xf]
    %v462 = vld [vmem:[#allocation5 + $0x584] sm:$0xf]
    %v463 = vld [vmem:[#allocation5 + $0x588] sm:$0xf]
    %v464 = vld [vmem:[#allocation5 + $0x58c] sm:$0xf]
    %v465 = vld [vmem:[#allocation5 + $0x590] sm:$0xf]
    %v466 = vld [vmem:[#allocation5 + $0x594] sm:$0xf]
    %v467 = vld [vmem:[#allocation5 + $0x598] sm:$0xf]
    %v468 = vld [vmem:[#allocation5 + $0x59c] sm:$0xf]
    %v469 = vld [vmem:[#allocation5 + $0x5a0] sm:$0xf]
    %v470 = vld [vmem:[#allocation5 + $0x5a4] sm:$0xf]
    %v471 = vld [vmem:[#allocation5 + $0x5a8] sm:$0xf]
    %v472 = vld [vmem:[#allocation5 + $0x5ac] sm:$0xf]
    %v473 = vld [vmem:[#allocation5 + $0x5b0] sm:$0xf]
    %v474 = vld [vmem:[#allocation5 + $0x5b4] sm:$0xf]
    %v475 = vld [vmem:[#allocation5 + $0x5b8] sm:$0xf]
    %v476 = vld [vmem:[#allocation5 + $0x5bc] sm:$0xf]
    %v477 = vld [vmem:[#allocation5 + $0x5c0] sm:$0xf]
    %v478 = vld [vmem:[#allocation5 + $0x5c4] sm:$0xf]
    %v479 = vld [vmem:[#allocation5 + $0x5c8] sm:$0xf]
    %v480 = vld [vmem:[#allocation5 + $0x5cc] sm:$0xf]
    %v481 = vld [vmem:[#allocation5 + $0x5d0] sm:$0xf]
    %v482 = vld [vmem:[#allocation5 + $0x5d4] sm:$0xf]
    %v483 = vld [vmem:[#allocation5 + $0x5d8] sm:$0xf]
    %v484 = vld [vmem:[#allocation5 + $0x5dc] sm:$0xf]
    %v485 = vld [vmem:[#allocation5 + $0x5e0] sm:$0xf]
    %v486 = vld [vmem:[#allocation5 + $0x5e4] sm:$0xf]
    %v487 = vld [vmem:[#allocation5 + $0x5e8] sm:$0xf]
    %v488 = vld [vmem:[#allocation5 + $0x5ec] sm:$0xf]
    %v489 = vld [vmem:[#allocation5 + $0x5f0] sm:$0xf]
    %v490 = vld [vmem:[#allocation5 + $0x5f4] sm:$0xf]
    %v491 = vld [vmem:[#allocation5 + $0x5f8] sm:$0xf]
    %v492 = vld [vmem:[#allocation5 + $0x5fc] sm:$0xf]
    %v493 = vld [vmem:[#allocation5 + $0x600] sm:$0xf]
    %v494 = vld [vmem:[#allocation5 + $0x604] sm:$0xf]
    %v495 = vld [vmem:[#allocation5 + $0x608] sm:$0xf]
    %v496 = vld [vmem:[#allocation5 + $0x60c] sm:$0xf]
    %v497 = vld [vmem:[#allocation5 + $0x610] sm:$0xf]
    %v498 = vld [vmem:[#allocation5 + $0x614] sm:$0xf]
    %v499 = vld [vmem:[#allocation5 + $0x618] sm:$0xf]
    %v500 = vld [vmem:[#allocation5 + $0x61c] sm:$0xf]
    %v501 = vld [vmem:[#allocation5 + $0x620] sm:$0xf]
    %v502 = vld [vmem:[#allocation5 + $0x624] sm:$0xf]
    %v503 = vld [vmem:[#allocation5 + $0x628] sm:$0xf]
    %v504 = vld [vmem:[#allocation5 + $0x62c] sm:$0xf]
    %v505 = vld [vmem:[#allocation5 + $0x630] sm:$0xf]
    %v506 = vld [vmem:[#allocation5 + $0x634] sm:$0xf]
    %v507 = vld [vmem:[#allocation5 + $0x638] sm:$0xf]
    %v508 = vld [vmem:[#allocation5 + $0x63c] sm:$0xf]
    %v509 = vld [vmem:[#allocation5 + $0x640] sm:$0xf]
    %v510 = vld [vmem:[#allocation5 + $0x644] sm:$0xf]
    %v511 = vld [vmem:[#allocation5 + $0x648] sm:$0xf]
    %v512 = vld [vmem:[#allocation5 + $0x64c] sm:$0xf]
    %v513 = vld [vmem:[#allocation5 + $0x650] sm:$0xf]
    %v514 = vld [vmem:[#allocation5 + $0x654] sm:$0xf]
    %v515 = vld [vmem:[#allocation5 + $0x658] sm:$0xf]
    %v516 = vld [vmem:[#allocation5 + $0x65c] sm:$0xf]
    %v517 = vld [vmem:[#allocation5 + $0x660] sm:$0xf]
    %v518 = vld [vmem:[#allocation5 + $0x664] sm:$0xf]
    %v519 = vld [vmem:[#allocation5 + $0x668] sm:$0xf]
    %v520 = vld [vmem:[#allocation5 + $0x66c] sm:$0xf]
    %v521 = vld [vmem:[#allocation5 + $0x670] sm:$0xf]
    %v522 = vld [vmem:[#allocation5 + $0x674] sm:$0xf]
    %v523 = vld [vmem:[#allocation5 + $0x678] sm:$0xf]
    %v524 = vld [vmem:[#allocation5 + $0x67c] sm:$0xf]
    %v525 = vld [vmem:[%s2] sm:$0x1]
    %v527 = vlaneseq
    %v528 = vshrl.u32 %v527, 7
    %v529 = vsub.s32 0, %v528
    %v530 = vrot.slane %v525, %v529
    %v558 = vunpack.c.l.b16 %v83
    %v559 = vunpack.c.h.b16 %v83
    %v560 = vunpack.c.l.b16 %v84
    %v561 = vunpack.c.h.b16 %v84
    %v562 = vunpack.c.l.b16 %v85
    %v563 = vunpack.c.h.b16 %v85
    %v564 = vunpack.c.l.b16 %v86
    %v565 = vunpack.c.h.b16 %v86
    %v566 = vunpack.c.l.b16 %v87
    %v567 = vunpack.c.h.b16 %v87
    %v568 = vunpack.c.l.b16 %v88
    %v569 = vunpack.c.h.b16 %v88
    %v570 = vunpack.c.l.b16 %v89
    %v571 = vunpack.c.h.b16 %v89
    %v572 = vunpack.c.l.b16 %v90
    %v573 = vunpack.c.h.b16 %v90
    %v574 = vunpack.c.l.b16 %v91
    %v575 = vunpack.c.h.b16 %v91
    %v576 = vunpack.c.l.b16 %v92
    %v577 = vunpack.c.h.b16 %v92
    %v578 = vunpack.c.l.b16 %v93
    %v579 = vunpack.c.h.b16 %v93
    %v580 = vunpack.c.l.b16 %v94
    %v581 = vunpack.c.h.b16 %v94
    %v582 = vunpack.c.l.b16 %v95
    %v583 = vunpack.c.h.b16 %v95
    %v584 = vunpack.c.l.b16 %v96
    %v585 = vunpack.c.h.b16 %v96
    %v586 = vunpack.c.l.b16 %v97
    %v587 = vunpack.c.h.b16 %v97
    %v588 = vunpack.c.l.b16 %v98
    %v589 = vunpack.c.h.b16 %v98
    %v590 = vunpack.c.l.b16 %v99
    %v591 = vunpack.c.h.b16 %v99
    %v592 = vunpack.c.l.b16 %v100
    %v593 = vunpack.c.h.b16 %v100
    %v594 = vunpack.c.l.b16 %v101
    %v595 = vunpack.c.h.b16 %v101
    %v596 = vunpack.c.l.b16 %v102
    %v597 = vunpack.c.h.b16 %v102
    %v598 = vunpack.c.l.b16 %v103
    %v599 = vunpack.c.h.b16 %v103
    %v600 = vunpack.c.l.b16 %v104
    %v601 = vunpack.c.h.b16 %v104
    %v602 = vunpack.c.l.b16 %v105
    %v603 = vunpack.c.h.b16 %v105
    %v604 = vunpack.c.l.b16 %v106
    %v605 = vunpack.c.h.b16 %v106
    %v606 = vunpack.c.l.b16 %v107
    %v607 = vunpack.c.h.b16 %v107
    %v608 = vunpack.c.l.b16 %v108
    %v609 = vunpack.c.h.b16 %v108
    %v610 = vpack.c.b16 %v584, %v558
    %v611 = vpack.c.b16 %v585, %v559
    %v612 = vpack.c.b16 %v586, %v560
    %v613 = vpack.c.b16 %v587, %v561
    %v614 = vpack.c.b16 %v588, %v562
    %v615 = vpack.c.b16 %v589, %v563
    %v616 = vpack.c.b16 %v590, %v564
    %v617 = vpack.c.b16 %v591, %v565
    %v618 = vpack.c.b16 %v592, %v566
    %v619 = vpack.c.b16 %v593, %v567
    %v620 = vpack.c.b16 %v594, %v568
    %v621 = vpack.c.b16 %v595, %v569
    %v622 = vpack.c.b16 %v596, %v570
    %v623 = vpack.c.b16 %v597, %v571
    %v624 = vpack.c.b16 %v598, %v572
    %v625 = vpack.c.b16 %v599, %v573
    %v626 = vpack.c.b16 %v600, %v574
    %v627 = vpack.c.b16 %v601, %v575
    %v628 = vpack.c.b16 %v602, %v576
    %v629 = vpack.c.b16 %v603, %v577
    %v630 = vpack.c.b16 %v604, %v578
    %v631 = vpack.c.b16 %v605, %v579
    %v632 = vpack.c.b16 %v606, %v580
    %v633 = vpack.c.b16 %v607, %v581
    %v634 = vpack.c.b16 %v608, %v582
    %v635 = vpack.c.b16 %v609, %v583
    %v1078 = vunpack.c.l.b16 %v109
    %v1079 = vunpack.c.l.b16 %v110
    %v1080 = vunpack.c.l.b16 %v111
    %v1081 = vunpack.c.l.b16 %v112
    %v1082 = vunpack.c.l.b16 %v113
    %v1083 = vunpack.c.l.b16 %v114
    %v1084 = vunpack.c.l.b16 %v115
    %v1085 = vunpack.c.l.b16 %v116
    %v1086 = vunpack.c.l.b16 %v117
    %v1087 = vunpack.c.l.b16 %v118
    %v1088 = vunpack.c.l.b16 %v119
    %v1089 = vunpack.c.l.b16 %v120
    %v1090 = vunpack.c.l.b16 %v121
    %v1091 = vunpack.c.l.b16 %v122
    %v1092 = vunpack.c.l.b16 %v123
    %v1093 = vunpack.c.l.b16 %v124
    %v1094 = vunpack.c.l.b16 %v125
    %v1095 = vunpack.c.l.b16 %v126
    %v1096 = vunpack.c.l.b16 %v127
    %v1097 = vunpack.c.l.b16 %v128
    %v1098 = vunpack.c.l.b16 %v129
    %v1099 = vunpack.c.l.b16 %v130
    %v1100 = vunpack.c.l.b16 %v131
    %v1101 = vunpack.c.l.b16 %v132
    %v1102 = vunpack.c.l.b16 %v133
    %v1103 = vunpack.c.l.b16 %v134
    %v1104 = vunpack.c.l.b16 %v135
    %v1105 = vunpack.c.l.b16 %v136
    %v1106 = vunpack.c.l.b16 %v137
    %v1107 = vunpack.c.l.b16 %v138
    %v1108 = vunpack.c.l.b16 %v139
    %v1109 = vunpack.c.l.b16 %v140
    %v1110 = vunpack.c.l.b16 %v141
    %v1111 = vunpack.c.l.b16 %v142
    %v1112 = vunpack.c.l.b16 %v143
    %v1113 = vunpack.c.l.b16 %v144
    %v1114 = vunpack.c.l.b16 %v145
    %v1115 = vunpack.c.l.b16 %v146
    %v1116 = vunpack.c.l.b16 %v147
    %v1117 = vunpack.c.l.b16 %v148
    %v1118 = vunpack.c.l.b16 %v149
    %v1119 = vunpack.c.l.b16 %v150
    %v1120 = vunpack.c.l.b16 %v151
    %v1121 = vunpack.c.l.b16 %v152
    %v1122 = vunpack.c.l.b16 %v153
    %v1123 = vunpack.c.l.b16 %v154
    %v1124 = vunpack.c.l.b16 %v155
    %v1125 = vunpack.c.l.b16 %v156
    %v1126 = vunpack.c.l.b16 %v157
    %v1127 = vunpack.c.l.b16 %v158
    %v1128 = vunpack.c.l.b16 %v159
    %v1129 = vunpack.c.l.b16 %v160
    %v1130 = vunpack.c.l.b16 %v161
    %v1131 = vunpack.c.l.b16 %v162
    %v1132 = vunpack.c.l.b16 %v163
    %v1133 = vunpack.c.l.b16 %v164
    %v1134 = vunpack.c.l.b16 %v165
    %v1135 = vunpack.c.l.b16 %v166
    %v1136 = vunpack.c.l.b16 %v167
    %v1137 = vunpack.c.l.b16 %v168
    %v1138 = vunpack.c.l.b16 %v169
    %v1139 = vunpack.c.l.b16 %v170
    %v1140 = vunpack.c.l.b16 %v171
    %v1141 = vunpack.c.l.b16 %v172
    %v1142 = vunpack.c.l.b16 %v173
    %v1143 = vunpack.c.l.b16 %v174
    %v1144 = vunpack.c.l.b16 %v175
    %v1145 = vunpack.c.l.b16 %v176
    %v1146 = vunpack.c.l.b16 %v177
    %v1147 = vunpack.c.l.b16 %v178
    %v1148 = vunpack.c.l.b16 %v179
    %v1149 = vunpack.c.l.b16 %v180
    %v1150 = vunpack.c.l.b16 %v181
    %v1151 = vunpack.c.l.b16 %v182
    %v1152 = vunpack.c.l.b16 %v183
    %v1153 = vunpack.c.l.b16 %v184
    %v1154 = vunpack.c.l.b16 %v185
    %v1155 = vunpack.c.l.b16 %v186
    %v1156 = vunpack.c.l.b16 %v187
    %v1157 = vunpack.c.l.b16 %v188
    %v1158 = vunpack.c.l.b16 %v189
    %v1159 = vunpack.c.l.b16 %v190
    %v1160 = vunpack.c.l.b16 %v191
    %v1161 = vunpack.c.l.b16 %v192
    %v1162 = vunpack.c.l.b16 %v193
    %v1163 = vunpack.c.l.b16 %v194
    %v1164 = vunpack.c.l.b16 %v195
    %v1165 = vunpack.c.l.b16 %v196
    %v1166 = vunpack.c.l.b16 %v197
    %v1167 = vunpack.c.l.b16 %v198
    %v1168 = vunpack.c.l.b16 %v199
    %v1169 = vunpack.c.l.b16 %v200
    %v1170 = vunpack.c.l.b16 %v201
    %v1171 = vunpack.c.l.b16 %v202
    %v1172 = vunpack.c.l.b16 %v203
    %v1173 = vunpack.c.l.b16 %v204
    %v1174 = vunpack.c.l.b16 %v205
    %v1175 = vunpack.c.l.b16 %v206
    %v1176 = vunpack.c.l.b16 %v207
    %v1177 = vunpack.c.l.b16 %v208
    %v1178 = vunpack.c.l.b16 %v209
    %v1179 = vunpack.c.l.b16 %v210
    %v1180 = vunpack.c.l.b16 %v211
    %v1181 = vunpack.c.l.b16 %v212
    %v1182 = vunpack.c.l.b16 %v213
    %v1183 = vunpack.c.l.b16 %v214
    %v1184 = vunpack.c.l.b16 %v215
    %v1185 = vunpack.c.l.b16 %v216
    %v1186 = vunpack.c.l.b16 %v217
    %v1187 = vunpack.c.l.b16 %v218
    %v1188 = vunpack.c.l.b16 %v219
    %v1189 = vunpack.c.l.b16 %v220
    %v1190 = vunpack.c.l.b16 %v221
    %v1191 = vunpack.c.l.b16 %v222
    %v1192 = vunpack.c.l.b16 %v223
    %v1193 = vunpack.c.l.b16 %v224
    %v1194 = vunpack.c.l.b16 %v225
    %v1195 = vunpack.c.l.b16 %v226
    %v1196 = vunpack.c.l.b16 %v227
    %v1197 = vunpack.c.l.b16 %v228
    %v1198 = vunpack.c.l.b16 %v229
    %v1199 = vunpack.c.l.b16 %v230
    %v1200 = vunpack.c.l.b16 %v231
    %v1201 = vunpack.c.l.b16 %v232
    %v1202 = vunpack.c.l.b16 %v233
    %v1203 = vunpack.c.l.b16 %v234
    %v1204 = vunpack.c.l.b16 %v235
    %v1205 = vunpack.c.l.b16 %v236
    %v1206 = vunpack.c.l.b16 %v237
    %v1207 = vunpack.c.l.b16 %v238
    %v1208 = vunpack.c.l.b16 %v239
    %v1209 = vunpack.c.l.b16 %v240
    %v1210 = vunpack.c.l.b16 %v241
    %v1211 = vunpack.c.l.b16 %v242
    %v1212 = vunpack.c.l.b16 %v243
    %v1213 = vunpack.c.l.b16 %v244
    %v1214 = vunpack.c.l.b16 %v245
    %v1215 = vunpack.c.l.b16 %v246
    %v1216 = vunpack.c.l.b16 %v247
    %v1217 = vunpack.c.l.b16 %v248
    %v1218 = vunpack.c.l.b16 %v249
    %v1219 = vunpack.c.l.b16 %v250
    %v1220 = vunpack.c.l.b16 %v251
    %v1221 = vunpack.c.l.b16 %v252
    %v1222 = vunpack.c.l.b16 %v253
    %v1223 = vunpack.c.l.b16 %v254
    %v1224 = vunpack.c.l.b16 %v255
    %v1225 = vunpack.c.l.b16 %v256
    %v1226 = vunpack.c.l.b16 %v257
    %v1227 = vunpack.c.l.b16 %v258
    %v1228 = vunpack.c.l.b16 %v259
    %v1229 = vunpack.c.l.b16 %v260
    %v1230 = vunpack.c.l.b16 %v261
    %v1231 = vunpack.c.l.b16 %v262
    %v1232 = vunpack.c.l.b16 %v263
    %v1233 = vunpack.c.l.b16 %v264
    %v1234 = vunpack.c.l.b16 %v265
    %v1235 = vunpack.c.l.b16 %v266
    %v1236 = vunpack.c.l.b16 %v267
    %v1237 = vunpack.c.l.b16 %v268
    %v1238 = vunpack.c.l.b16 %v269
    %v1239 = vunpack.c.l.b16 %v270
    %v1240 = vunpack.c.l.b16 %v271
    %v1241 = vunpack.c.l.b16 %v272
    %v1242 = vunpack.c.l.b16 %v273
    %v1243 = vunpack.c.l.b16 %v274
    %v1244 = vunpack.c.l.b16 %v275
    %v1245 = vunpack.c.l.b16 %v276
    %v1246 = vunpack.c.l.b16 %v277
    %v1247 = vunpack.c.l.b16 %v278
    %v1248 = vunpack.c.l.b16 %v279
    %v1249 = vunpack.c.l.b16 %v280
    %v1250 = vunpack.c.l.b16 %v281
    %v1251 = vunpack.c.l.b16 %v282
    %v1252 = vunpack.c.l.b16 %v283
    %v1253 = vunpack.c.l.b16 %v284
    %v1254 = vunpack.c.l.b16 %v285
    %v1255 = vunpack.c.l.b16 %v286
    %v1256 = vunpack.c.l.b16 %v287
    %v1257 = vunpack.c.l.b16 %v288
    %v1258 = vunpack.c.l.b16 %v289
    %v1259 = vunpack.c.l.b16 %v290
    %v1260 = vunpack.c.l.b16 %v291
    %v1261 = vunpack.c.l.b16 %v292
    %v1262 = vunpack.c.l.b16 %v293
    %v1263 = vunpack.c.l.b16 %v294
    %v1264 = vunpack.c.l.b16 %v295
    %v1265 = vunpack.c.l.b16 %v296
    %v1266 = vunpack.c.l.b16 %v297
    %v1267 = vunpack.c.l.b16 %v298
    %v1268 = vunpack.c.l.b16 %v299
    %v1269 = vunpack.c.l.b16 %v300
    %v1270 = vunpack.c.l.b16 %v301
    %v1271 = vunpack.c.l.b16 %v302
    %v1272 = vunpack.c.l.b16 %v303
    %v1273 = vunpack.c.l.b16 %v304
    %v1274 = vunpack.c.l.b16 %v305
    %v1275 = vunpack.c.l.b16 %v306
    %v1276 = vunpack.c.l.b16 %v307
    %v1277 = vunpack.c.l.b16 %v308
    %v1278 = vunpack.c.l.b16 %v309
    %v1279 = vunpack.c.l.b16 %v310
    %v1280 = vunpack.c.l.b16 %v311
    %v1281 = vunpack.c.l.b16 %v312
    %v1282 = vunpack.c.l.b16 %v313
    %v1283 = vunpack.c.l.b16 %v314
    %v1284 = vunpack.c.l.b16 %v315
    %v1285 = vunpack.c.l.b16 %v316
    %v1286 = vunpack.c.l.b16 %v317
    %v1287 = vunpack.c.l.b16 %v318
    %v1288 = vunpack.c.l.b16 %v319
    %v1289 = vunpack.c.l.b16 %v320
    %v1290 = vunpack.c.l.b16 %v321
    %v1291 = vunpack.c.l.b16 %v322
    %v1292 = vunpack.c.l.b16 %v323
    %v1293 = vunpack.c.l.b16 %v324
    %v1294 = vunpack.c.l.b16 %v325
    %v1295 = vunpack.c.l.b16 %v326
    %v1296 = vunpack.c.l.b16 %v327
    %v1297 = vunpack.c.l.b16 %v328
    %v1298 = vunpack.c.l.b16 %v329
    %v1299 = vunpack.c.l.b16 %v330
    %v1300 = vunpack.c.l.b16 %v331
    %v1301 = vunpack.c.l.b16 %v332
    %v1302 = vunpack.c.l.b16 %v333
    %v1303 = vunpack.c.l.b16 %v334
    %v1304 = vunpack.c.l.b16 %v335
    %v1305 = vunpack.c.l.b16 %v336
    %v1306 = vunpack.c.l.b16 %v337
    %v1307 = vunpack.c.l.b16 %v338
    %v1308 = vunpack.c.l.b16 %v339
    %v1309 = vunpack.c.l.b16 %v340
    %v1310 = vunpack.c.l.b16 %v341
    %v1311 = vunpack.c.l.b16 %v342
    %v1312 = vunpack.c.l.b16 %v343
    %v1313 = vunpack.c.l.b16 %v344
    %v1314 = vunpack.c.l.b16 %v345
    %v1315 = vunpack.c.l.b16 %v346
    %v1316 = vunpack.c.l.b16 %v347
    %v1317 = vunpack.c.l.b16 %v348
    %v1318 = vunpack.c.l.b16 %v349
    %v1319 = vunpack.c.l.b16 %v350
    %v1320 = vunpack.c.l.b16 %v351
    %v1321 = vunpack.c.l.b16 %v352
    %v1322 = vunpack.c.l.b16 %v353
    %v1323 = vunpack.c.l.b16 %v354
    %v1324 = vunpack.c.l.b16 %v355
    %v1325 = vunpack.c.l.b16 %v356
    %v1326 = vunpack.c.l.b16 %v357
    %v1327 = vunpack.c.l.b16 %v358
    %v1328 = vunpack.c.l.b16 %v359
    %v1329 = vunpack.c.l.b16 %v360
    %v1330 = vunpack.c.l.b16 %v361
    %v1331 = vunpack.c.l.b16 %v362
    %v1332 = vunpack.c.l.b16 %v363
    %v1333 = vunpack.c.l.b16 %v364
    %v1334 = vunpack.c.l.b16 %v365
    %v1335 = vunpack.c.l.b16 %v366
    %v1336 = vunpack.c.l.b16 %v367
    %v1337 = vunpack.c.l.b16 %v368
    %v1338 = vunpack.c.l.b16 %v369
    %v1339 = vunpack.c.l.b16 %v370
    %v1340 = vunpack.c.l.b16 %v371
    %v1341 = vunpack.c.l.b16 %v372
    %v1342 = vunpack.c.l.b16 %v373
    %v1343 = vunpack.c.l.b16 %v374
    %v1344 = vunpack.c.l.b16 %v375
    %v1345 = vunpack.c.l.b16 %v376
    %v1346 = vunpack.c.l.b16 %v377
    %v1347 = vunpack.c.l.b16 %v378
    %v1348 = vunpack.c.l.b16 %v379
    %v1349 = vunpack.c.l.b16 %v380
    %v1350 = vunpack.c.l.b16 %v381
    %v1351 = vunpack.c.l.b16 %v382
    %v1352 = vunpack.c.l.b16 %v383
    %v1353 = vunpack.c.l.b16 %v384
    %v1354 = vunpack.c.l.b16 %v385
    %v1355 = vunpack.c.l.b16 %v386
    %v1356 = vunpack.c.l.b16 %v387
    %v1357 = vunpack.c.l.b16 %v388
    %v1358 = vunpack.c.l.b16 %v389
    %v1359 = vunpack.c.l.b16 %v390
    %v1360 = vunpack.c.l.b16 %v391
    %v1361 = vunpack.c.l.b16 %v392
    %v1362 = vunpack.c.l.b16 %v393
    %v1363 = vunpack.c.l.b16 %v394
    %v1364 = vunpack.c.l.b16 %v395
    %v1365 = vunpack.c.l.b16 %v396
    %v1366 = vunpack.c.l.b16 %v397
    %v1367 = vunpack.c.l.b16 %v398
    %v1368 = vunpack.c.l.b16 %v399
    %v1369 = vunpack.c.l.b16 %v400
    %v1370 = vunpack.c.l.b16 %v401
    %v1371 = vunpack.c.l.b16 %v402
    %v1372 = vunpack.c.l.b16 %v403
    %v1373 = vunpack.c.l.b16 %v404
    %v1374 = vunpack.c.l.b16 %v405
    %v1375 = vunpack.c.l.b16 %v406
    %v1376 = vunpack.c.l.b16 %v407
    %v1377 = vunpack.c.l.b16 %v408
    %v1378 = vunpack.c.l.b16 %v409
    %v1379 = vunpack.c.l.b16 %v410
    %v1380 = vunpack.c.l.b16 %v411
    %v1381 = vunpack.c.l.b16 %v412
    %v1382 = vunpack.c.l.b16 %v413
    %v1383 = vunpack.c.l.b16 %v414
    %v1384 = vunpack.c.l.b16 %v415
    %v1385 = vunpack.c.l.b16 %v416
    %v1386 = vunpack.c.l.b16 %v417
    %v1387 = vunpack.c.l.b16 %v418
    %v1388 = vunpack.c.l.b16 %v419
    %v1389 = vunpack.c.l.b16 %v420
    %v1390 = vunpack.c.l.b16 %v421
    %v1391 = vunpack.c.l.b16 %v422
    %v1392 = vunpack.c.l.b16 %v423
    %v1393 = vunpack.c.l.b16 %v424
    %v1394 = vunpack.c.l.b16 %v425
    %v1395 = vunpack.c.l.b16 %v426
    %v1396 = vunpack.c.l.b16 %v427
    %v1397 = vunpack.c.l.b16 %v428
    %v1398 = vunpack.c.l.b16 %v429
    %v1399 = vunpack.c.l.b16 %v430
    %v1400 = vunpack.c.l.b16 %v431
    %v1401 = vunpack.c.l.b16 %v432
    %v1402 = vunpack.c.l.b16 %v433
    %v1403 = vunpack.c.l.b16 %v434
    %v1404 = vunpack.c.l.b16 %v435
    %v1405 = vunpack.c.l.b16 %v436
    %v1406 = vunpack.c.l.b16 %v437
    %v1407 = vunpack.c.l.b16 %v438
    %v1408 = vunpack.c.l.b16 %v439
    %v1409 = vunpack.c.l.b16 %v440
    %v1410 = vunpack.c.l.b16 %v441
    %v1411 = vunpack.c.l.b16 %v442
    %v1412 = vunpack.c.l.b16 %v443
    %v1413 = vunpack.c.l.b16 %v444
    %v1414 = vunpack.c.l.b16 %v445
    %v1415 = vunpack.c.l.b16 %v446
    %v1416 = vunpack.c.l.b16 %v447
    %v1417 = vunpack.c.l.b16 %v448
    %v1418 = vunpack.c.l.b16 %v449
    %v1419 = vunpack.c.l.b16 %v450
    %v1420 = vunpack.c.l.b16 %v451
    %v1421 = vunpack.c.l.b16 %v452
    %v1422 = vunpack.c.l.b16 %v453
    %v1423 = vunpack.c.l.b16 %v454
    %v1424 = vunpack.c.l.b16 %v455
    %v1425 = vunpack.c.l.b16 %v456
    %v1426 = vunpack.c.l.b16 %v457
    %v1427 = vunpack.c.l.b16 %v458
    %v1428 = vunpack.c.l.b16 %v459
    %v1429 = vunpack.c.l.b16 %v460
    %v1430 = vunpack.c.l.b16 %v461
    %v1431 = vunpack.c.l.b16 %v462
    %v1432 = vunpack.c.l.b16 %v463
    %v1433 = vunpack.c.l.b16 %v464
    %v1434 = vunpack.c.l.b16 %v465
    %v1435 = vunpack.c.l.b16 %v466
    %v1436 = vunpack.c.l.b16 %v467
    %v1437 = vunpack.c.l.b16 %v468
    %v1438 = vunpack.c.l.b16 %v469
    %v1439 = vunpack.c.l.b16 %v470
    %v1440 = vunpack.c.l.b16 %v471
    %v1441 = vunpack.c.l.b16 %v472
    %v1442 = vunpack.c.l.b16 %v473
    %v1443 = vunpack.c.l.b16 %v474
    %v1444 = vunpack.c.l.b16 %v475
    %v1445 = vunpack.c.l.b16 %v476
    %v1446 = vunpack.c.l.b16 %v477
    %v1447 = vunpack.c.l.b16 %v478
    %v1448 = vunpack.c.l.b16 %v479
    %v1449 = vunpack.c.l.b16 %v480
    %v1450 = vunpack.c.l.b16 %v481
    %v1451 = vunpack.c.l.b16 %v482
    %v1452 = vunpack.c.l.b16 %v483
    %v1453 = vunpack.c.l.b16 %v484
    %v1454 = vunpack.c.l.b16 %v485
    %v1455 = vunpack.c.l.b16 %v486
    %v1456 = vunpack.c.l.b16 %v487
    %v1457 = vunpack.c.l.b16 %v488
    %v1458 = vunpack.c.l.b16 %v489
    %v1459 = vunpack.c.l.b16 %v490
    %v1460 = vunpack.c.l.b16 %v491
    %v1461 = vunpack.c.l.b16 %v492
    %v1462 = vunpack.c.l.b16 %v493
    %v1463 = vunpack.c.l.b16 %v494
    %v1464 = vunpack.c.l.b16 %v495
    %v1465 = vunpack.c.l.b16 %v496
    %v1466 = vunpack.c.l.b16 %v497
    %v1467 = vunpack.c.l.b16 %v498
    %v1468 = vunpack.c.l.b16 %v499
    %v1469 = vunpack.c.l.b16 %v500
    %v1470 = vunpack.c.l.b16 %v501
    %v1471 = vunpack.c.l.b16 %v502
    %v1472 = vunpack.c.l.b16 %v503
    %v1473 = vunpack.c.l.b16 %v504
    %v1474 = vunpack.c.l.b16 %v505
    %v1475 = vunpack.c.l.b16 %v506
    %v1476 = vunpack.c.l.b16 %v507
    %v1477 = vunpack.c.l.b16 %v508
    %v1478 = vunpack.c.l.b16 %v509
    %v1479 = vunpack.c.l.b16 %v510
    %v1480 = vunpack.c.l.b16 %v511
    %v1481 = vunpack.c.l.b16 %v512
    %v1482 = vunpack.c.l.b16 %v513
    %v1483 = vunpack.c.l.b16 %v514
    %v1484 = vunpack.c.l.b16 %v515
    %v1485 = vunpack.c.l.b16 %v516
    %v1486 = vunpack.c.l.b16 %v517
    %v1487 = vunpack.c.l.b16 %v518
    %v1488 = vunpack.c.l.b16 %v519
    %v1489 = vunpack.c.l.b16 %v520
    %v1490 = vunpack.c.l.b16 %v521
    %v1491 = vunpack.c.l.b16 %v522
    %v1492 = vunpack.c.l.b16 %v523
    %v1493 = vunpack.c.l.b16 %v524
    %v1494 = vpack.c.b16 %v1079, %v1078
    %v1495 = vpack.c.b16 %v1081, %v1080
    %v1496 = vpack.c.b16 %v1083, %v1082
    %v1497 = vpack.c.b16 %v1085, %v1084
    %v1498 = vpack.c.b16 %v1087, %v1086
    %v1499 = vpack.c.b16 %v1089, %v1088
    %v1500 = vpack.c.b16 %v1091, %v1090
    %v1501 = vpack.c.b16 %v1093, %v1092
    %v1502 = vpack.c.b16 %v1095, %v1094
    %v1503 = vpack.c.b16 %v1097, %v1096
    %v1504 = vpack.c.b16 %v1099, %v1098
    %v1505 = vpack.c.b16 %v1101, %v1100
    %v1506 = vpack.c.b16 %v1103, %v1102
    %v1507 = vpack.c.b16 %v1105, %v1104
    %v1508 = vpack.c.b16 %v1107, %v1106
    %v1509 = vpack.c.b16 %v1109, %v1108
    %v1510 = vpack.c.b16 %v1111, %v1110
    %v1511 = vpack.c.b16 %v1113, %v1112
    %v1512 = vpack.c.b16 %v1115, %v1114
    %v1513 = vpack.c.b16 %v1117, %v1116
    %v1514 = vpack.c.b16 %v1119, %v1118
    %v1515 = vpack.c.b16 %v1121, %v1120
    %v1516 = vpack.c.b16 %v1123, %v1122
    %v1517 = vpack.c.b16 %v1125, %v1124
    %v1518 = vpack.c.b16 %v1127, %v1126
    %v1519 = vpack.c.b16 %v1129, %v1128
    %v1520 = vpack.c.b16 %v1131, %v1130
    %v1521 = vpack.c.b16 %v1133, %v1132
    %v1522 = vpack.c.b16 %v1135, %v1134
    %v1523 = vpack.c.b16 %v1137, %v1136
    %v1524 = vpack.c.b16 %v1139, %v1138
    %v1525 = vpack.c.b16 %v1141, %v1140
    %v1526 = vpack.c.b16 %v1143, %v1142
    %v1527 = vpack.c.b16 %v1145, %v1144
    %v1528 = vpack.c.b16 %v1147, %v1146
    %v1529 = vpack.c.b16 %v1149, %v1148
    %v1530 = vpack.c.b16 %v1151, %v1150
    %v1531 = vpack.c.b16 %v1153, %v1152
    %v1532 = vpack.c.b16 %v1155, %v1154
    %v1533 = vpack.c.b16 %v1157, %v1156
    %v1534 = vpack.c.b16 %v1159, %v1158
    %v1535 = vpack.c.b16 %v1161, %v1160
    %v1536 = vpack.c.b16 %v1163, %v1162
    %v1537 = vpack.c.b16 %v1165, %v1164
    %v1538 = vpack.c.b16 %v1167, %v1166
    %v1539 = vpack.c.b16 %v1169, %v1168
    %v1540 = vpack.c.b16 %v1171, %v1170
    %v1541 = vpack.c.b16 %v1173, %v1172
    %v1542 = vpack.c.b16 %v1175, %v1174
    %v1543 = vpack.c.b16 %v1177, %v1176
    %v1544 = vpack.c.b16 %v1179, %v1178
    %v1545 = vpack.c.b16 %v1181, %v1180
    %v1546 = vpack.c.b16 %v1183, %v1182
    %v1547 = vpack.c.b16 %v1185, %v1184
    %v1548 = vpack.c.b16 %v1187, %v1186
    %v1549 = vpack.c.b16 %v1189, %v1188
    %v1550 = vpack.c.b16 %v1191, %v1190
    %v1551 = vpack.c.b16 %v1193, %v1192
    %v1552 = vpack.c.b16 %v1195, %v1194
    %v1553 = vpack.c.b16 %v1197, %v1196
    %v1554 = vpack.c.b16 %v1199, %v1198
    %v1555 = vpack.c.b16 %v1201, %v1200
    %v1556 = vpack.c.b16 %v1203, %v1202
    %v1557 = vpack.c.b16 %v1205, %v1204
    %v1558 = vpack.c.b16 %v1207, %v1206
    %v1559 = vpack.c.b16 %v1209, %v1208
    %v1560 = vpack.c.b16 %v1211, %v1210
    %v1561 = vpack.c.b16 %v1213, %v1212
    %v1562 = vpack.c.b16 %v1215, %v1214
    %v1563 = vpack.c.b16 %v1217, %v1216
    %v1564 = vpack.c.b16 %v1219, %v1218
    %v1565 = vpack.c.b16 %v1221, %v1220
    %v1566 = vpack.c.b16 %v1223, %v1222
    %v1567 = vpack.c.b16 %v1225, %v1224
    %v1568 = vpack.c.b16 %v1227, %v1226
    %v1569 = vpack.c.b16 %v1229, %v1228
    %v1570 = vpack.c.b16 %v1231, %v1230
    %v1571 = vpack.c.b16 %v1233, %v1232
    %v1572 = vpack.c.b16 %v1235, %v1234
    %v1573 = vpack.c.b16 %v1237, %v1236
    %v1574 = vpack.c.b16 %v1239, %v1238
    %v1575 = vpack.c.b16 %v1241, %v1240
    %v1576 = vpack.c.b16 %v1243, %v1242
    %v1577 = vpack.c.b16 %v1245, %v1244
    %v1578 = vpack.c.b16 %v1247, %v1246
    %v1579 = vpack.c.b16 %v1249, %v1248
    %v1580 = vpack.c.b16 %v1251, %v1250
    %v1581 = vpack.c.b16 %v1253, %v1252
    %v1582 = vpack.c.b16 %v1255, %v1254
    %v1583 = vpack.c.b16 %v1257, %v1256
    %v1584 = vpack.c.b16 %v1259, %v1258
    %v1585 = vpack.c.b16 %v1261, %v1260
    %v1586 = vpack.c.b16 %v1263, %v1262
    %v1587 = vpack.c.b16 %v1265, %v1264
    %v1588 = vpack.c.b16 %v1267, %v1266
    %v1589 = vpack.c.b16 %v1269, %v1268
    %v1590 = vpack.c.b16 %v1271, %v1270
    %v1591 = vpack.c.b16 %v1273, %v1272
    %v1592 = vpack.c.b16 %v1275, %v1274
    %v1593 = vpack.c.b16 %v1277, %v1276
    %v1594 = vpack.c.b16 %v1279, %v1278
    %v1595 = vpack.c.b16 %v1281, %v1280
    %v1596 = vpack.c.b16 %v1283, %v1282
    %v1597 = vpack.c.b16 %v1285, %v1284
    %v1598 = vpack.c.b16 %v1287, %v1286
    %v1599 = vpack.c.b16 %v1289, %v1288
    %v1600 = vpack.c.b16 %v1291, %v1290
    %v1601 = vpack.c.b16 %v1293, %v1292
    %v1602 = vpack.c.b16 %v1295, %v1294
    %v1603 = vpack.c.b16 %v1297, %v1296
    %v1604 = vpack.c.b16 %v1299, %v1298
    %v1605 = vpack.c.b16 %v1301, %v1300
    %v1606 = vpack.c.b16 %v1303, %v1302
    %v1607 = vpack.c.b16 %v1305, %v1304
    %v1608 = vpack.c.b16 %v1307, %v1306
    %v1609 = vpack.c.b16 %v1309, %v1308
    %v1610 = vpack.c.b16 %v1311, %v1310
    %v1611 = vpack.c.b16 %v1313, %v1312
    %v1612 = vpack.c.b16 %v1315, %v1314
    %v1613 = vpack.c.b16 %v1317, %v1316
    %v1614 = vpack.c.b16 %v1319, %v1318
    %v1615 = vpack.c.b16 %v1321, %v1320
    %v1616 = vpack.c.b16 %v1323, %v1322
    %v1617 = vpack.c.b16 %v1325, %v1324
    %v1618 = vpack.c.b16 %v1327, %v1326
    %v1619 = vpack.c.b16 %v1329, %v1328
    %v1620 = vpack.c.b16 %v1331, %v1330
    %v1621 = vpack.c.b16 %v1333, %v1332
    %v1622 = vpack.c.b16 %v1335, %v1334
    %v1623 = vpack.c.b16 %v1337, %v1336
    %v1624 = vpack.c.b16 %v1339, %v1338
    %v1625 = vpack.c.b16 %v1341, %v1340
    %v1626 = vpack.c.b16 %v1343, %v1342
    %v1627 = vpack.c.b16 %v1345, %v1344
    %v1628 = vpack.c.b16 %v1347, %v1346
    %v1629 = vpack.c.b16 %v1349, %v1348
    %v1630 = vpack.c.b16 %v1351, %v1350
    %v1631 = vpack.c.b16 %v1353, %v1352
    %v1632 = vpack.c.b16 %v1355, %v1354
    %v1633 = vpack.c.b16 %v1357, %v1356
    %v1634 = vpack.c.b16 %v1359, %v1358
    %v1635 = vpack.c.b16 %v1361, %v1360
    %v1636 = vpack.c.b16 %v1363, %v1362
    %v1637 = vpack.c.b16 %v1365, %v1364
    %v1638 = vpack.c.b16 %v1367, %v1366
    %v1639 = vpack.c.b16 %v1369, %v1368
    %v1640 = vpack.c.b16 %v1371, %v1370
    %v1641 = vpack.c.b16 %v1373, %v1372
    %v1642 = vpack.c.b16 %v1375, %v1374
    %v1643 = vpack.c.b16 %v1377, %v1376
    %v1644 = vpack.c.b16 %v1379, %v1378
    %v1645 = vpack.c.b16 %v1381, %v1380
    %v1646 = vpack.c.b16 %v1383, %v1382
    %v1647 = vpack.c.b16 %v1385, %v1384
    %v1648 = vpack.c.b16 %v1387, %v1386
    %v1649 = vpack.c.b16 %v1389, %v1388
    %v1650 = vpack.c.b16 %v1391, %v1390
    %v1651 = vpack.c.b16 %v1393, %v1392
    %v1652 = vpack.c.b16 %v1395, %v1394
    %v1653 = vpack.c.b16 %v1397, %v1396
    %v1654 = vpack.c.b16 %v1399, %v1398
    %v1655 = vpack.c.b16 %v1401, %v1400
    %v1656 = vpack.c.b16 %v1403, %v1402
    %v1657 = vpack.c.b16 %v1405, %v1404
    %v1658 = vpack.c.b16 %v1407, %v1406
    %v1659 = vpack.c.b16 %v1409, %v1408
    %v1660 = vpack.c.b16 %v1411, %v1410
    %v1661 = vpack.c.b16 %v1413, %v1412
    %v1662 = vpack.c.b16 %v1415, %v1414
    %v1663 = vpack.c.b16 %v1417, %v1416
    %v1664 = vpack.c.b16 %v1419, %v1418
    %v1665 = vpack.c.b16 %v1421, %v1420
    %v1666 = vpack.c.b16 %v1423, %v1422
    %v1667 = vpack.c.b16 %v1425, %v1424
    %v1668 = vpack.c.b16 %v1427, %v1426
    %v1669 = vpack.c.b16 %v1429, %v1428
    %v1670 = vpack.c.b16 %v1431, %v1430
    %v1671 = vpack.c.b16 %v1433, %v1432
    %v1672 = vpack.c.b16 %v1435, %v1434
    %v1673 = vpack.c.b16 %v1437, %v1436
    %v1674 = vpack.c.b16 %v1439, %v1438
    %v1675 = vpack.c.b16 %v1441, %v1440
    %v1676 = vpack.c.b16 %v1443, %v1442
    %v1677 = vpack.c.b16 %v1445, %v1444
    %v1678 = vpack.c.b16 %v1447, %v1446
    %v1679 = vpack.c.b16 %v1449, %v1448
    %v1680 = vpack.c.b16 %v1451, %v1450
    %v1681 = vpack.c.b16 %v1453, %v1452
    %v1682 = vpack.c.b16 %v1455, %v1454
    %v1683 = vpack.c.b16 %v1457, %v1456
    %v1684 = vpack.c.b16 %v1459, %v1458
    %v1685 = vpack.c.b16 %v1461, %v1460
    %v1686 = vpack.c.b16 %v1463, %v1462
    %v1687 = vpack.c.b16 %v1465, %v1464
    %v1688 = vpack.c.b16 %v1467, %v1466
    %v1689 = vpack.c.b16 %v1469, %v1468
    %v1690 = vpack.c.b16 %v1471, %v1470
    %v1691 = vpack.c.b16 %v1473, %v1472
    %v1692 = vpack.c.b16 %v1475, %v1474
    %v1693 = vpack.c.b16 %v1477, %v1476
    %v1694 = vpack.c.b16 %v1479, %v1478
    %v1695 = vpack.c.b16 %v1481, %v1480
    %v1696 = vpack.c.b16 %v1483, %v1482
    %v1697 = vpack.c.b16 %v1485, %v1484
    %v1698 = vpack.c.b16 %v1487, %v1486
    %v1699 = vpack.c.b16 %v1489, %v1488
    %v1700 = vpack.c.b16 %v1491, %v1490
    %v1701 = vpack.c.b16 %v1493, %v1492
    %1910 = vmatprep.subr.bf16.mxu0 0
    %1911 = vmatpush1.bf16.msra.mxu0 %v1494
    %1912 = vmatprep.subr.bf16.mxu0 0
    %1913 = vmatpush1.bf16.msra.mxu0 %v1495
    %1914 = vmatprep.subr.bf16.mxu0 0
    %1915 = vmatpush1.bf16.msra.mxu0 %v1496
    %1916 = vmatprep.subr.bf16.mxu0 0
    %1917 = vmatpush1.bf16.msra.mxu0 %v1497
    %1918 = vmatprep.subr.bf16.mxu0 0
    %1919 = vmatpush1.bf16.msra.mxu0 %v1498
    %1920 = vmatprep.subr.bf16.mxu0 0
    %1921 = vmatpush1.bf16.msra.mxu0 %v1499
    %1922 = vmatprep.subr.bf16.mxu0 0
    %1923 = vmatpush1.bf16.msra.mxu0 %v1500
    %1924 = vmatprep.subr.bf16.mxu0 0
    %1925 = vmatpush1.bf16.msra.mxu0 %v1501
    %1926 = vmatprep.subr.bf16.mxu0 0
    %1927 = vmatpush1.bf16.msra.mxu0 %v1502
    %1928 = vmatprep.subr.bf16.mxu0 0
    %1929 = vmatpush1.bf16.msra.mxu0 %v1503
    %1930 = vmatprep.subr.bf16.mxu0 0
    %1931 = vmatpush1.bf16.msra.mxu0 %v1504
    %1932 = vmatprep.subr.bf16.mxu0 0
    %1933 = vmatpush1.bf16.msra.mxu0 %v1505
    %1934 = vmatprep.subr.bf16.mxu0 0
    %1935 = vmatpush1.bf16.msra.mxu0 %v1506
    %1936 = vmatprep.subr.bf16.mxu0 0
    %1937 = vmatpush1.bf16.msra.mxu0 %v1507
    %1938 = vmatprep.subr.bf16.mxu0 0
    %1939 = vmatpush1.bf16.msra.mxu0 %v1508
    %1940 = vmatprep.subr.bf16.mxu0 0
    %1941 = vmatpush1.bf16.msra.mxu0 %v1509
    %1942 = vmatprep.mubr.bf16.mxu0 %v611
    %1943 = vmatmul.mubr.bf16.gmra.mrb[0].mxu0 %v610
    %v1944 = vpop.f32.mrb[0].mxu0
    %v1945 = vadd.f32 %v530, %v1944
    %v1946 = vpop.f32.mrb[0].mxu0
    %v1947 = vpop.f32.mrb[0].mxu0
    %v1948 = vadd.f32 %v530, %v1947
    %v1949 = vpop.f32.mrb[0].mxu0
    %1950 = vdwg.mxu0
    %1951 = vmatprep.subr.bf16.mxu0 0
    %1952 = vmatpush1.bf16.msra.mxu0 %v1510
    %1953 = vmatprep.subr.bf16.mxu0 0
    %1954 = vmatpush1.bf16.msra.mxu0 %v1511
    %1955 = vmatprep.subr.bf16.mxu0 0
    %1956 = vmatpush1.bf16.msra.mxu0 %v1512
    %1957 = vmatprep.subr.bf16.mxu0 0
    %1958 = vmatpush1.bf16.msra.mxu0 %v1513
    %1959 = vmatprep.subr.bf16.mxu0 0
    %1960 = vmatpush1.bf16.msra.mxu0 %v1514
    %1961 = vmatprep.subr.bf16.mxu0 0
    %1962 = vmatpush1.bf16.msra.mxu0 %v1515
    %1963 = vmatprep.subr.bf16.mxu0 0
    %1964 = vmatpush1.bf16.msra.mxu0 %v1516
    %1965 = vmatprep.subr.bf16.mxu0 0
    %1966 = vmatpush1.bf16.msra.mxu0 %v1517
    %1967 = vmatprep.subr.bf16.mxu0 0
    %1968 = vmatpush1.bf16.msra.mxu0 %v1518
    %1969 = vmatprep.subr.bf16.mxu0 0
    %1970 = vmatpush1.bf16.msra.mxu0 %v1519
    %1971 = vmatprep.subr.bf16.mxu0 0
    %1972 = vmatpush1.bf16.msra.mxu0 %v1520
    %1973 = vmatprep.subr.bf16.mxu0 0
    %1974 = vmatpush1.bf16.msra.mxu0 %v1521
    %1975 = vmatprep.subr.bf16.mxu0 0
    %1976 = vmatpush1.bf16.msra.mxu0 %v1522
    %1977 = vmatprep.subr.bf16.mxu0 0
    %1978 = vmatpush1.bf16.msra.mxu0 %v1523
    %1979 = vmatprep.subr.bf16.mxu0 0
    %1980 = vmatpush1.bf16.msra.mxu0 %v1524
    %1981 = vmatprep.subr.bf16.mxu0 0
    %1982 = vmatpush1.bf16.msra.mxu0 %v1525
    %1983 = vmatprep.mubr.bf16.mxu0 %v613
    %1984 = vmatmul.mubr.bf16.gmra.mrb[0].mxu0 %v612
    %v1985 = vpop.f32.mrb[0].mxu0
    %v1986 = vadd.f32 %v1945, %v1985
    %v1987 = vpop.f32.mrb[0].mxu0
    %v1988 = vpop.f32.mrb[0].mxu0
    %v1989 = vadd.f32 %v1948, %v1988
    %v1990 = vpop.f32.mrb[0].mxu0
    %1991 = vdwg.mxu0
    %1992 = vmatprep.subr.bf16.mxu0 0
    %1993 = vmatpush1.bf16.msra.mxu0 %v1526
    %1994 = vmatprep.subr.bf16.mxu0 0
    %1995 = vmatpush1.bf16.msra.mxu0 %v1527
    %1996 = vmatprep.subr.bf16.mxu0 0
    %1997 = vmatpush1.bf16.msra.mxu0 %v1528
    %1998 = vmatprep.subr.bf16.mxu0 0
    %1999 = vmatpush1.bf16.msra.mxu0 %v1529
    %2000 = vmatprep.subr.bf16.mxu0 0
    %2001 = vmatpush1.bf16.msra.mxu0 %v1530
    %2002 = vmatprep.subr.bf16.mxu0 0
    %2003 = vmatpush1.bf16.msra.mxu0 %v1531
    %2004 = vmatprep.subr.bf16.mxu0 0
    %2005 = vmatpush1.bf16.msra.mxu0 %v1532
    %2006 = vmatprep.subr.bf16.mxu0 0
    %2007 = vmatpush1.bf16.msra.mxu0 %v1533
    %2008 = vmatprep.subr.bf16.mxu0 0
    %2009 = vmatpush1.bf16.msra.mxu0 %v1534
    %2010 = vmatprep.subr.bf16.mxu0 0
    %2011 = vmatpush1.bf16.msra.mxu0 %v1535
    %2012 = vmatprep.subr.bf16.mxu0 0
    %2013 = vmatpush1.bf16.msra.mxu0 %v1536
    %2014 = vmatprep.subr.bf16.mxu0 0
    %2015 = vmatpush1.bf16.msra.mxu0 %v1537
    %2016 = vmatprep.subr.bf16.mxu0 0
    %2017 = vmatpush1.bf16.msra.mxu0 %v1538
    %2018 = vmatprep.subr.bf16.mxu0 0
    %2019 = vmatpush1.bf16.msra.mxu0 %v1539
    %2020 = vmatprep.subr.bf16.mxu0 0
    %2021 = vmatpush1.bf16.msra.mxu0 %v1540
    %2022 = vmatprep.subr.bf16.mxu0 0
    %2023 = vmatpush1.bf16.msra.mxu0 %v1541
    %2024 = vmatprep.mubr.bf16.mxu0 %v615
    %2025 = vmatmul.mubr.bf16.gmra.mrb[0].mxu0 %v614
    %v2026 = vpop.f32.mrb[0].mxu0
    %v2027 = vadd.f32 %v1986, %v2026
    %v2028 = vpop.f32.mrb[0].mxu0
    %v2029 = vpop.f32.mrb[0].mxu0
    %v2030 = vadd.f32 %v1989, %v2029
    %v2031 = vpop.f32.mrb[0].mxu0
    %2032 = vdwg.mxu0
    %2033 = vmatprep.subr.bf16.mxu0 0
    %2034 = vmatpush1.bf16.msra.mxu0 %v1542
    %2035 = vmatprep.subr.bf16.mxu0 0
    %2036 = vmatpush1.bf16.msra.mxu0 %v1543
    %2037 = vmatprep.subr.bf16.mxu0 0
    %2038 = vmatpush1.bf16.msra.mxu0 %v1544
    %2039 = vmatprep.subr.bf16.mxu0 0
    %2040 = vmatpush1.bf16.msra.mxu0 %v1545
    %2041 = vmatprep.subr.bf16.mxu0 0
    %2042 = vmatpush1.bf16.msra.mxu0 %v1546
    %2043 = vmatprep.subr.bf16.mxu0 0
    %2044 = vmatpush1.bf16.msra.mxu0 %v1547
    %2045 = vmatprep.subr.bf16.mxu0 0
    %2046 = vmatpush1.bf16.msra.mxu0 %v1548
    %2047 = vmatprep.subr.bf16.mxu0 0
    %2048 = vmatpush1.bf16.msra.mxu0 %v1549
    %2049 = vmatprep.subr.bf16.mxu0 0
    %2050 = vmatpush1.bf16.msra.mxu0 %v1550
    %2051 = vmatprep.subr.bf16.mxu0 0
    %2052 = vmatpush1.bf16.msra.mxu0 %v1551
    %2053 = vmatprep.subr.bf16.mxu0 0
    %2054 = vmatpush1.bf16.msra.mxu0 %v1552
    %2055 = vmatprep.subr.bf16.mxu0 0
    %2056 = vmatpush1.bf16.msra.mxu0 %v1553
    %2057 = vmatprep.subr.bf16.mxu0 0
    %2058 = vmatpush1.bf16.msra.mxu0 %v1554
    %2059 = vmatprep.subr.bf16.mxu0 0
    %2060 = vmatpush1.bf16.msra.mxu0 %v1555
    %2061 = vmatprep.subr.bf16.mxu0 0
    %2062 = vmatpush1.bf16.msra.mxu0 %v1556
    %2063 = vmatprep.subr.bf16.mxu0 0
    %2064 = vmatpush1.bf16.msra.mxu0 %v1557
    %2065 = vmatprep.mubr.bf16.mxu0 %v617
    %2066 = vmatmul.mubr.bf16.gmra.mrb[0].mxu0 %v616
    %v2067 = vpop.f32.mrb[0].mxu0
    %v2068 = vadd.f32 %v2027, %v2067
    %v2069 = vpop.f32.mrb[0].mxu0
    %v2070 = vpop.f32.mrb[0].mxu0
    %v2071 = vadd.f32 %v2030, %v2070
    %v2072 = vpop.f32.mrb[0].mxu0
    %2073 = vdwg.mxu0
    %2074 = vmatprep.subr.bf16.mxu0 0
    %2075 = vmatpush1.bf16.msra.mxu0 %v1558
    %2076 = vmatprep.subr.bf16.mxu0 0
    %2077 = vmatpush1.bf16.msra.mxu0 %v1559
    %2078 = vmatprep.subr.bf16.mxu0 0
    %2079 = vmatpush1.bf16.msra.mxu0 %v1560
    %2080 = vmatprep.subr.bf16.mxu0 0
    %2081 = vmatpush1.bf16.msra.mxu0 %v1561
    %2082 = vmatprep.subr.bf16.mxu0 0
    %2083 = vmatpush1.bf16.msra.mxu0 %v1562
    %2084 = vmatprep.subr.bf16.mxu0 0
    %2085 = vmatpush1.bf16.msra.mxu0 %v1563
    %2086 = vmatprep.subr.bf16.mxu0 0
    %2087 = vmatpush1.bf16.msra.mxu0 %v1564
    %2088 = vmatprep.subr.bf16.mxu0 0
    %2089 = vmatpush1.bf16.msra.mxu0 %v1565
    %2090 = vmatprep.subr.bf16.mxu0 0
    %2091 = vmatpush1.bf16.msra.mxu0 %v1566
    %2092 = vmatprep.subr.bf16.mxu0 0
    %2093 = vmatpush1.bf16.msra.mxu0 %v1567
    %2094 = vmatprep.subr.bf16.mxu0 0
    %2095 = vmatpush1.bf16.msra.mxu0 %v1568
    %2096 = vmatprep.subr.bf16.mxu0 0
    %2097 = vmatpush1.bf16.msra.mxu0 %v1569
    %2098 = vmatprep.subr.bf16.mxu0 0
    %2099 = vmatpush1.bf16.msra.mxu0 %v1570
    %2100 = vmatprep.subr.bf16.mxu0 0
    %2101 = vmatpush1.bf16.msra.mxu0 %v1571
    %2102 = vmatprep.subr.bf16.mxu0 0
    %2103 = vmatpush1.bf16.msra.mxu0 %v1572
    %2104 = vmatprep.subr.bf16.mxu0 0
    %2105 = vmatpush1.bf16.msra.mxu0 %v1573
    %2106 = vmatprep.mubr.bf16.mxu0 %v619
    %2107 = vmatmul.mubr.bf16.gmra.mrb[0].mxu0 %v618
    %v2108 = vpop.f32.mrb[0].mxu0
    %v2109 = vadd.f32 %v2068, %v2108
    %v2110 = vpop.f32.mrb[0].mxu0
    %v2111 = vpop.f32.mrb[0].mxu0
    %v2112 = vadd.f32 %v2071, %v2111
    %v2113 = vpop.f32.mrb[0].mxu0
    %2114 = vdwg.mxu0
    %2115 = vmatprep.subr.bf16.mxu0 0
    %2116 = vmatpush1.bf16.msra.mxu0 %v1574
    %2117 = vmatprep.subr.bf16.mxu0 0
    %2118 = vmatpush1.bf16.msra.mxu0 %v1575
    %2119 = vmatprep.subr.bf16.mxu0 0
    %2120 = vmatpush1.bf16.msra.mxu0 %v1576
    %2121 = vmatprep.subr.bf16.mxu0 0
    %2122 = vmatpush1.bf16.msra.mxu0 %v1577
    %2123 = vmatprep.subr.bf16.mxu0 0
    %2124 = vmatpush1.bf16.msra.mxu0 %v1578
    %2125 = vmatprep.subr.bf16.mxu0 0
    %2126 = vmatpush1.bf16.msra.mxu0 %v1579
    %2127 = vmatprep.subr.bf16.mxu0 0
    %2128 = vmatpush1.bf16.msra.mxu0 %v1580
    %2129 = vmatprep.subr.bf16.mxu0 0
    %2130 = vmatpush1.bf16.msra.mxu0 %v1581
    %2131 = vmatprep.subr.bf16.mxu0 0
    %2132 = vmatpush1.bf16.msra.mxu0 %v1582
    %2133 = vmatprep.subr.bf16.mxu0 0
    %2134 = vmatpush1.bf16.msra.mxu0 %v1583
    %2135 = vmatprep.subr.bf16.mxu0 0
    %2136 = vmatpush1.bf16.msra.mxu0 %v1584
    %2137 = vmatprep.subr.bf16.mxu0 0
    %2138 = vmatpush1.bf16.msra.mxu0 %v1585
    %2139 = vmatprep.subr.bf16.mxu0 0
    %2140 = vmatpush1.bf16.msra.mxu0 %v1586
    %2141 = vmatprep.subr.bf16.mxu0 0
    %2142 = vmatpush1.bf16.msra.mxu0 %v1587
    %2143 = vmatprep.subr.bf16.mxu0 0
    %2144 = vmatpush1.bf16.msra.mxu0 %v1588
    %2145 = vmatprep.subr.bf16.mxu0 0
    %2146 = vmatpush1.bf16.msra.mxu0 %v1589
    %2147 = vmatprep.mubr.bf16.mxu0 %v621
    %2148 = vmatmul.mubr.bf16.gmra.mrb[0].mxu0 %v620
    %v2149 = vpop.f32.mrb[0].mxu0
    %v2150 = vadd.f32 %v2109, %v2149
    %v2151 = vpop.f32.mrb[0].mxu0
    %v2152 = vpop.f32.mrb[0].mxu0
    %v2153 = vadd.f32 %v2112, %v2152
    %v2154 = vpop.f32.mrb[0].mxu0
    %2155 = vdwg.mxu0
    %2156 = vmatprep.subr.bf16.mxu0 0
    %2157 = vmatpush1.bf16.msra.mxu0 %v1590
    %2158 = vmatprep.subr.bf16.mxu0 0
    %2159 = vmatpush1.bf16.msra.mxu0 %v1591
    %2160 = vmatprep.subr.bf16.mxu0 0
    %2161 = vmatpush1.bf16.msra.mxu0 %v1592
    %2162 = vmatprep.subr.bf16.mxu0 0
    %2163 = vmatpush1.bf16.msra.mxu0 %v1593
    %2164 = vmatprep.subr.bf16.mxu0 0
    %2165 = vmatpush1.bf16.msra.mxu0 %v1594
    %2166 = vmatprep.subr.bf16.mxu0 0
    %2167 = vmatpush1.bf16.msra.mxu0 %v1595
    %2168 = vmatprep.subr.bf16.mxu0 0
    %2169 = vmatpush1.bf16.msra.mxu0 %v1596
    %2170 = vmatprep.subr.bf16.mxu0 0
    %2171 = vmatpush1.bf16.msra.mxu0 %v1597
    %2172 = vmatprep.subr.bf16.mxu0 0
    %2173 = vmatpush1.bf16.msra.mxu0 %v1598
    %2174 = vmatprep.subr.bf16.mxu0 0
    %2175 = vmatpush1.bf16.msra.mxu0 %v1599
    %2176 = vmatprep.subr.bf16.mxu0 0
    %2177 = vmatpush1.bf16.msra.mxu0 %v1600
    %2178 = vmatprep.subr.bf16.mxu0 0
    %2179 = vmatpush1.bf16.msra.mxu0 %v1601
    %2180 = vmatprep.subr.bf16.mxu0 0
    %2181 = vmatpush1.bf16.msra.mxu0 %v1602
    %2182 = vmatprep.subr.bf16.mxu0 0
    %2183 = vmatpush1.bf16.msra.mxu0 %v1603
    %2184 = vmatprep.subr.bf16.mxu0 0
    %2185 = vmatpush1.bf16.msra.mxu0 %v1604
    %2186 = vmatprep.subr.bf16.mxu0 0
    %2187 = vmatpush1.bf16.msra.mxu0 %v1605
    %2188 = vmatprep.mubr.bf16.mxu0 %v623
    %2189 = vmatmul.mubr.bf16.gmra.mrb[0].mxu0 %v622
    %v2190 = vpop.f32.mrb[0].mxu0
    %v2191 = vadd.f32 %v2150, %v2190
    %v2192 = vpop.f32.mrb[0].mxu0
    %v2193 = vpop.f32.mrb[0].mxu0
    %v2194 = vadd.f32 %v2153, %v2193
    %v2195 = vpop.f32.mrb[0].mxu0
    %2196 = vdwg.mxu0
    %2197 = vmatprep.subr.bf16.mxu0 0
    %2198 = vmatpush1.bf16.msra.mxu0 %v1606
    %2199 = vmatprep.subr.bf16.mxu0 0
    %2200 = vmatpush1.bf16.msra.mxu0 %v1607
    %2201 = vmatprep.subr.bf16.mxu0 0
    %2202 = vmatpush1.bf16.msra.mxu0 %v1608
    %2203 = vmatprep.subr.bf16.mxu0 0
    %2204 = vmatpush1.bf16.msra.mxu0 %v1609
    %2205 = vmatprep.subr.bf16.mxu0 0
    %2206 = vmatpush1.bf16.msra.mxu0 %v1610
    %2207 = vmatprep.subr.bf16.mxu0 0
    %2208 = vmatpush1.bf16.msra.mxu0 %v1611
    %2209 = vmatprep.subr.bf16.mxu0 0
    %2210 = vmatpush1.bf16.msra.mxu0 %v1612
    %2211 = vmatprep.subr.bf16.mxu0 0
    %2212 = vmatpush1.bf16.msra.mxu0 %v1613
    %2213 = vmatprep.subr.bf16.mxu0 0
    %2214 = vmatpush1.bf16.msra.mxu0 %v1614
    %2215 = vmatprep.subr.bf16.mxu0 0
    %2216 = vmatpush1.bf16.msra.mxu0 %v1615
    %2217 = vmatprep.subr.bf16.mxu0 0
    %2218 = vmatpush1.bf16.msra.mxu0 %v1616
    %2219 = vmatprep.subr.bf16.mxu0 0
    %2220 = vmatpush1.bf16.msra.mxu0 %v1617
    %2221 = vmatprep.subr.bf16.mxu0 0
    %2222 = vmatpush1.bf16.msra.mxu0 %v1618
    %2223 = vmatprep.subr.bf16.mxu0 0
    %2224 = vmatpush1.bf16.msra.mxu0 %v1619
    %2225 = vmatprep.subr.bf16.mxu0 0
    %2226 = vmatpush1.bf16.msra.mxu0 %v1620
    %2227 = vmatprep.subr.bf16.mxu0 0
    %2228 = vmatpush1.bf16.msra.mxu0 %v1621
    %2229 = vmatprep.mubr.bf16.mxu0 %v625
    %2230 = vmatmul.mubr.bf16.gmra.mrb[0].mxu0 %v624
    %v2231 = vpop.f32.mrb[0].mxu0
    %v2232 = vadd.f32 %v2191, %v2231
    %v2233 = vpop.f32.mrb[0].mxu0
    %v2234 = vpop.f32.mrb[0].mxu0
    %v2235 = vadd.f32 %v2194, %v2234
    %v2236 = vpop.f32.mrb[0].mxu0
    %2237 = vdwg.mxu0
    %2238 = vmatprep.subr.bf16.mxu0 0
    %2239 = vmatpush1.bf16.msra.mxu0 %v1622
    %2240 = vmatprep.subr.bf16.mxu0 0
    %2241 = vmatpush1.bf16.msra.mxu0 %v1623
    %2242 = vmatprep.subr.bf16.mxu0 0
    %2243 = vmatpush1.bf16.msra.mxu0 %v1624
    %2244 = vmatprep.subr.bf16.mxu0 0
    %2245 = vmatpush1.bf16.msra.mxu0 %v1625
    %2246 = vmatprep.subr.bf16.mxu0 0
    %2247 = vmatpush1.bf16.msra.mxu0 %v1626
    %2248 = vmatprep.subr.bf16.mxu0 0
    %2249 = vmatpush1.bf16.msra.mxu0 %v1627
    %2250 = vmatprep.subr.bf16.mxu0 0
    %2251 = vmatpush1.bf16.msra.mxu0 %v1628
    %2252 = vmatprep.subr.bf16.mxu0 0
    %2253 = vmatpush1.bf16.msra.mxu0 %v1629
    %2254 = vmatprep.subr.bf16.mxu0 0
    %2255 = vmatpush1.bf16.msra.mxu0 %v1630
    %2256 = vmatprep.subr.bf16.mxu0 0
    %2257 = vmatpush1.bf16.msra.mxu0 %v1631
    %2258 = vmatprep.subr.bf16.mxu0 0
    %2259 = vmatpush1.bf16.msra.mxu0 %v1632
    %2260 = vmatprep.subr.bf16.mxu0 0
    %2261 = vmatpush1.bf16.msra.mxu0 %v1633
    %2262 = vmatprep.subr.bf16.mxu0 0
    %2263 = vmatpush1.bf16.msra.mxu0 %v1634
    %2264 = vmatprep.subr.bf16.mxu0 0
    %2265 = vmatpush1.bf16.msra.mxu0 %v1635
    %2266 = vmatprep.subr.bf16.mxu0 0
    %2267 = vmatpush1.bf16.msra.mxu0 %v1636
    %2268 = vmatprep.subr.bf16.mxu0 0
    %2269 = vmatpush1.bf16.msra.mxu0 %v1637
    %2270 = vmatprep.mubr.bf16.mxu0 %v627
    %2271 = vmatmul.mubr.bf16.gmra.mrb[0].mxu0 %v626
    %v2272 = vpop.f32.mrb[0].mxu0
    %v2273 = vadd.f32 %v2232, %v2272
    %v2274 = vpop.f32.mrb[0].mxu0
    %v2275 = vpop.f32.mrb[0].mxu0
    %v2276 = vadd.f32 %v2235, %v2275
    %v2277 = vpop.f32.mrb[0].mxu0
    %2278 = vdwg.mxu0
    %2279 = vmatprep.subr.bf16.mxu0 0
    %2280 = vmatpush1.bf16.msra.mxu0 %v1638
    %2281 = vmatprep.subr.bf16.mxu0 0
    %2282 = vmatpush1.bf16.msra.mxu0 %v1639
    %2283 = vmatprep.subr.bf16.mxu0 0
    %2284 = vmatpush1.bf16.msra.mxu0 %v1640
    %2285 = vmatprep.subr.bf16.mxu0 0
    %2286 = vmatpush1.bf16.msra.mxu0 %v1641
    %2287 = vmatprep.subr.bf16.mxu0 0
    %2288 = vmatpush1.bf16.msra.mxu0 %v1642
    %2289 = vmatprep.subr.bf16.mxu0 0
    %2290 = vmatpush1.bf16.msra.mxu0 %v1643
    %2291 = vmatprep.subr.bf16.mxu0 0
    %2292 = vmatpush1.bf16.msra.mxu0 %v1644
    %2293 = vmatprep.subr.bf16.mxu0 0
    %2294 = vmatpush1.bf16.msra.mxu0 %v1645
    %2295 = vmatprep.subr.bf16.mxu0 0
    %2296 = vmatpush1.bf16.msra.mxu0 %v1646
    %2297 = vmatprep.subr.bf16.mxu0 0
    %2298 = vmatpush1.bf16.msra.mxu0 %v1647
    %2299 = vmatprep.subr.bf16.mxu0 0
    %2300 = vmatpush1.bf16.msra.mxu0 %v1648
    %2301 = vmatprep.subr.bf16.mxu0 0
    %2302 = vmatpush1.bf16.msra.mxu0 %v1649
    %2303 = vmatprep.subr.bf16.mxu0 0
    %2304 = vmatpush1.bf16.msra.mxu0 %v1650
    %2305 = vmatprep.subr.bf16.mxu0 0
    %2306 = vmatpush1.bf16.msra.mxu0 %v1651
    %2307 = vmatprep.subr.bf16.mxu0 0
    %2308 = vmatpush1.bf16.msra.mxu0 %v1652
    %2309 = vmatprep.subr.bf16.mxu0 0
    %2310 = vmatpush1.bf16.msra.mxu0 %v1653
    %2311 = vmatprep.mubr.bf16.mxu0 %v629
    %2312 = vmatmul.mubr.bf16.gmra.mrb[0].mxu0 %v628
    %v2313 = vpop.f32.mrb[0].mxu0
    %v2314 = vadd.f32 %v2273, %v2313
    %v2315 = vpop.f32.mrb[0].mxu0
    %v2316 = vpop.f32.mrb[0].mxu0
    %v2317 = vadd.f32 %v2276, %v2316
    %v2318 = vpop.f32.mrb[0].mxu0
    %2319 = vdwg.mxu0
    %2320 = vmatprep.subr.bf16.mxu0 0
    %2321 = vmatpush1.bf16.msra.mxu0 %v1654
    %2322 = vmatprep.subr.bf16.mxu0 0
    %2323 = vmatpush1.bf16.msra.mxu0 %v1655
    %2324 = vmatprep.subr.bf16.mxu0 0
    %2325 = vmatpush1.bf16.msra.mxu0 %v1656
    %2326 = vmatprep.subr.bf16.mxu0 0
    %2327 = vmatpush1.bf16.msra.mxu0 %v1657
    %2328 = vmatprep.subr.bf16.mxu0 0
    %2329 = vmatpush1.bf16.msra.mxu0 %v1658
    %2330 = vmatprep.subr.bf16.mxu0 0
    %2331 = vmatpush1.bf16.msra.mxu0 %v1659
    %2332 = vmatprep.subr.bf16.mxu0 0
    %2333 = vmatpush1.bf16.msra.mxu0 %v1660
    %2334 = vmatprep.subr.bf16.mxu0 0
    %2335 = vmatpush1.bf16.msra.mxu0 %v1661
    %2336 = vmatprep.subr.bf16.mxu0 0
    %2337 = vmatpush1.bf16.msra.mxu0 %v1662
    %2338 = vmatprep.subr.bf16.mxu0 0
    %2339 = vmatpush1.bf16.msra.mxu0 %v1663
    %2340 = vmatprep.subr.bf16.mxu0 0
    %2341 = vmatpush1.bf16.msra.mxu0 %v1664
    %2342 = vmatprep.subr.bf16.mxu0 0
    %2343 = vmatpush1.bf16.msra.mxu0 %v1665
    %2344 = vmatprep.subr.bf16.mxu0 0
    %2345 = vmatpush1.bf16.msra.mxu0 %v1666
    %2346 = vmatprep.subr.bf16.mxu0 0
    %2347 = vmatpush1.bf16.msra.mxu0 %v1667
    %2348 = vmatprep.subr.bf16.mxu0 0
    %2349 = vmatpush1.bf16.msra.mxu0 %v1668
    %2350 = vmatprep.subr.bf16.mxu0 0
    %2351 = vmatpush1.bf16.msra.mxu0 %v1669
    %2352 = vmatprep.mubr.bf16.mxu0 %v631
    %2353 = vmatmul.mubr.bf16.gmra.mrb[0].mxu0 %v630
    %v2354 = vpop.f32.mrb[0].mxu0
    %v2355 = vadd.f32 %v2314, %v2354
    %v2356 = vpop.f32.mrb[0].mxu0
    %v2357 = vpop.f32.mrb[0].mxu0
    %v2358 = vadd.f32 %v2317, %v2357
    %v2359 = vpop.f32.mrb[0].mxu0
    %2360 = vdwg.mxu0
    %2361 = vmatprep.subr.bf16.mxu0 0
    %2362 = vmatpush1.bf16.msra.mxu0 %v1670
    %2363 = vmatprep.subr.bf16.mxu0 0
    %2364 = vmatpush1.bf16.msra.mxu0 %v1671
    %2365 = vmatprep.subr.bf16.mxu0 0
    %2366 = vmatpush1.bf16.msra.mxu0 %v1672
    %2367 = vmatprep.subr.bf16.mxu0 0
    %2368 = vmatpush1.bf16.msra.mxu0 %v1673
    %2369 = vmatprep.subr.bf16.mxu0 0
    %2370 = vmatpush1.bf16.msra.mxu0 %v1674
    %2371 = vmatprep.subr.bf16.mxu0 0
    %2372 = vmatpush1.bf16.msra.mxu0 %v1675
    %2373 = vmatprep.subr.bf16.mxu0 0
    %2374 = vmatpush1.bf16.msra.mxu0 %v1676
    %2375 = vmatprep.subr.bf16.mxu0 0
    %2376 = vmatpush1.bf16.msra.mxu0 %v1677
    %2377 = vmatprep.subr.bf16.mxu0 0
    %2378 = vmatpush1.bf16.msra.mxu0 %v1678
    %2379 = vmatprep.subr.bf16.mxu0 0
    %2380 = vmatpush1.bf16.msra.mxu0 %v1679
    %2381 = vmatprep.subr.bf16.mxu0 0
    %2382 = vmatpush1.bf16.msra.mxu0 %v1680
    %2383 = vmatprep.subr.bf16.mxu0 0
    %2384 = vmatpush1.bf16.msra.mxu0 %v1681
    %2385 = vmatprep.subr.bf16.mxu0 0
    %2386 = vmatpush1.bf16.msra.mxu0 %v1682
    %2387 = vmatprep.subr.bf16.mxu0 0
    %2388 = vmatpush1.bf16.msra.mxu0 %v1683
    %2389 = vmatprep.subr.bf16.mxu0 0
    %2390 = vmatpush1.bf16.msra.mxu0 %v1684
    %2391 = vmatprep.subr.bf16.mxu0 0
    %2392 = vmatpush1.bf16.msra.mxu0 %v1685
    %2393 = vmatprep.mubr.bf16.mxu0 %v633
    %2394 = vmatmul.mubr.bf16.gmra.mrb[0].mxu0 %v632
    %v2395 = vpop.f32.mrb[0].mxu0
    %v2396 = vadd.f32 %v2355, %v2395
    %v2397 = vpop.f32.mrb[0].mxu0
    %v2398 = vpop.f32.mrb[0].mxu0
    %v2399 = vadd.f32 %v2358, %v2398
    %v2400 = vpop.f32.mrb[0].mxu0
    %2401 = vdwg.mxu0
    %2402 = vmatprep.subr.bf16.mxu0 0
    %2403 = vmatpush1.bf16.msra.mxu0 %v1686
    %2404 = vmatprep.subr.bf16.mxu0 0
    %2405 = vmatpush1.bf16.msra.mxu0 %v1687
    %2406 = vmatprep.subr.bf16.mxu0 0
    %2407 = vmatpush1.bf16.msra.mxu0 %v1688
    %2408 = vmatprep.subr.bf16.mxu0 0
    %2409 = vmatpush1.bf16.msra.mxu0 %v1689
    %2410 = vmatprep.subr.bf16.mxu0 0
    %2411 = vmatpush1.bf16.msra.mxu0 %v1690
    %2412 = vmatprep.subr.bf16.mxu0 0
    %2413 = vmatpush1.bf16.msra.mxu0 %v1691
    %2414 = vmatprep.subr.bf16.mxu0 0
    %2415 = vmatpush1.bf16.msra.mxu0 %v1692
    %2416 = vmatprep.subr.bf16.mxu0 0
    %2417 = vmatpush1.bf16.msra.mxu0 %v1693
    %2418 = vmatprep.subr.bf16.mxu0 0
    %2419 = vmatpush1.bf16.msra.mxu0 %v1694
    %2420 = vmatprep.subr.bf16.mxu0 0
    %2421 = vmatpush1.bf16.msra.mxu0 %v1695
    %2422 = vmatprep.subr.bf16.mxu0 0
    %2423 = vmatpush1.bf16.msra.mxu0 %v1696
    %2424 = vmatprep.subr.bf16.mxu0 0
    %2425 = vmatpush1.bf16.msra.mxu0 %v1697
    %2426 = vmatprep.subr.bf16.mxu0 0
    %2427 = vmatpush1.bf16.msra.mxu0 %v1698
    %2428 = vmatprep.subr.bf16.mxu0 0
    %2429 = vmatpush1.bf16.msra.mxu0 %v1699
    %2430 = vmatprep.subr.bf16.mxu0 0
    %2431 = vmatpush1.bf16.msra.mxu0 %v1700
    %2432 = vmatprep.subr.bf16.mxu0 0
    %2433 = vmatpush1.bf16.msra.mxu0 %v1701
    %2434 = vmatprep.mubr.bf16.mxu0 %v635
    %2435 = vmatmul.mubr.bf16.gmra.mrb[0].mxu0 %v634
    %v2436 = vpop.f32.mrb[0].mxu0
    %v2437 = vadd.f32 %v2396, %v2436
    %v2438 = vpop.f32.mrb[0].mxu0
    %v2439 = vpop.f32.mrb[0].mxu0
    %v2440 = vadd.f32 %v2399, %v2439
    %v2441 = vpop.f32.mrb[0].mxu0
    %2442 = vdwg.mxu0
    %v2443 = vmax.f32 %v2437, 0.0
    %v2444 = vmax.f32 %v2440, 0.0
    %v2445 = vpack.c.bf16 %v2444, %v2443
    %v2446 = vld [vmem:[#allocation7] sm:$0xf]
    %v2447 = vld [vmem:[#allocation7 + $0x4] sm:$0xf]
    %v2448 = vld [vmem:[#allocation7 + $0x8] sm:$0xf]
    %v2449 = vld [vmem:[#allocation7 + $0xc] sm:$0xf]
    %v2450 = vld [vmem:[#allocation7 + $0x10] sm:$0xf]
    %v2451 = vld [vmem:[#allocation7 + $0x14] sm:$0xf]
    %v2452 = vld [vmem:[#allocation7 + $0x18] sm:$0xf]
    %v2453 = vld [vmem:[#allocation7 + $0x1c] sm:$0xf]
    %v2454 = vld [vmem:[#allocation7 + $0x20] sm:$0xf]
    %v2455 = vld [vmem:[#allocation7 + $0x24] sm:$0xf]
    %v2456 = vld [vmem:[#allocation7 + $0x28] sm:$0xf]
    %v2457 = vld [vmem:[#allocation7 + $0x2c] sm:$0xf]
    %v2458 = vld [vmem:[#allocation7 + $0x30] sm:$0xf]
    %v2459 = vld [vmem:[#allocation7 + $0x34] sm:$0xf]
    %v2460 = vld [vmem:[#allocation7 + $0x38] sm:$0xf]
    %v2461 = vld [vmem:[#allocation7 + $0x3c] sm:$0xf]
    %v2462 = vld [vmem:[%s4] sm:$0x1]
    %v2464 = vlaneseq
    %v2465 = vshrl.u32 %v2464, 7
    %v2466 = vsub.s32 0, %v2465
    %v2467 = vrot.slane %v2462, %v2466
    %v2485 = vunpack.c.l.b16 %v2446
    %v2486 = vunpack.c.l.b16 %v2447
    %v2487 = vunpack.c.l.b16 %v2448
    %v2488 = vunpack.c.l.b16 %v2449
    %v2489 = vunpack.c.l.b16 %v2450
    %v2490 = vunpack.c.l.b16 %v2451
    %v2491 = vunpack.c.l.b16 %v2452
    %v2492 = vunpack.c.l.b16 %v2453
    %v2493 = vunpack.c.l.b16 %v2454
    %v2494 = vunpack.c.l.b16 %v2455
    %v2495 = vunpack.c.l.b16 %v2456
    %v2496 = vunpack.c.l.b16 %v2457
    %v2497 = vunpack.c.l.b16 %v2458
    %v2498 = vunpack.c.l.b16 %v2459
    %v2499 = vunpack.c.l.b16 %v2460
    %v2500 = vunpack.c.l.b16 %v2461
    %v2501 = vpack.c.b16 %v2486, %v2485
    %v2502 = vpack.c.b16 %v2488, %v2487
    %v2503 = vpack.c.b16 %v2490, %v2489
    %v2504 = vpack.c.b16 %v2492, %v2491
    %v2505 = vpack.c.b16 %v2494, %v2493
    %v2506 = vpack.c.b16 %v2496, %v2495
    %v2507 = vpack.c.b16 %v2498, %v2497
    %v2508 = vpack.c.b16 %v2500, %v2499
    %2517 = vmatprep.subr.bf16.mxu0 0
    %2518 = vmatpush1.bf16.msra.mxu0 %v2501
    %2519 = vmatprep.subr.bf16.mxu0 0
    %2520 = vmatpush1.bf16.msra.mxu0 %v2502
    %2521 = vmatprep.subr.bf16.mxu0 0
    %2522 = vmatpush1.bf16.msra.mxu0 %v2503
    %2523 = vmatprep.subr.bf16.mxu0 0
    %2524 = vmatpush1.bf16.msra.mxu0 %v2504
    %2525 = vmatprep.subr.bf16.mxu0 0
    %2526 = vmatpush1.bf16.msra.mxu0 %v2505
    %2527 = vmatprep.subr.bf16.mxu0 0
    %2528 = vmatpush1.bf16.msra.mxu0 %v2506
    %2529 = vmatprep.subr.bf16.mxu0 0
    %2530 = vmatpush1.bf16.msra.mxu0 %v2507
    %2531 = vmatprep.subr.bf16.mxu0 0
    %2532 = vmatpush1.bf16.msra.mxu0 %v2508
    %2533 = vmatprep.subr.bf16.mxu0 0
    %2534 = vmatpush1.bf16.msra.mxu0 0
    %2535 = vmatprep.subr.bf16.mxu0 0
    %2536 = vmatpush1.bf16.msra.mxu0 0
    %2537 = vmatprep.subr.bf16.mxu0 0
    %2538 = vmatpush1.bf16.msra.mxu0 0
    %2539 = vmatprep.subr.bf16.mxu0 0
    %2540 = vmatpush1.bf16.msra.mxu0 0
    %2541 = vmatprep.subr.bf16.mxu0 0
    %2542 = vmatpush1.bf16.msra.mxu0 0
    %2543 = vmatprep.subr.bf16.mxu0 0
    %2544 = vmatpush1.bf16.msra.mxu0 0
    %2545 = vmatprep.subr.bf16.mxu0 0
    %2546 = vmatpush1.bf16.msra.mxu0 0
    %2547 = vmatprep.subr.bf16.mxu0 0
    %2548 = vmatpush1.bf16.msra.mxu0 0
    %2549 = vmatprep.mubr.bf16.mxu0 0
    %2550 = vmatmul.mubr.bf16.gmra.mrb[0].mxu0 %v2445
    %v2551 = vpop.f32.mrb[0].mxu0
    %v2552 = vadd.f32 %v2467, %v2551
    %v2553 = vpop.f32.mrb[0].mxu0
    %v2554 = vpop.f32.mrb[0].mxu0
    %v2555 = vadd.f32 %v2467, %v2554
    %v2556 = vpop.f32.mrb[0].mxu0
    %2557 = vdwg.mxu0
    %v2558 = vpack.c.bf16 %v2555, %v2552
    %v2559 = vld [vmem:[#allocation8] sm:$0xf]
    %v2560 = vld [vmem:[#allocation8 + $0x4] sm:$0xf]
    %v2561 = vld [vmem:[#allocation8 + $0x8] sm:$0xf]
    %v2562 = vld [vmem:[#allocation8 + $0xc] sm:$0xf]
    %v2563 = vld [vmem:[#allocation8 + $0x10] sm:$0xf]
    %v2564 = vld [vmem:[#allocation8 + $0x14] sm:$0xf]
    %v2565 = vld [vmem:[#allocation8 + $0x18] sm:$0xf]
    %v2566 = vld [vmem:[#allocation8 + $0x1c] sm:$0xf]
    %v2567 = vld [vmem:[#allocation8 + $0x20] sm:$0xf]
    %v2568 = vld [vmem:[#allocation8 + $0x24] sm:$0xf]
    %v2569 = vld [vmem:[#allocation8 + $0x28] sm:$0xf]
    %v2570 = vld [vmem:[#allocation8 + $0x2c] sm:$0xf]
    %v2571 = vld [vmem:[#allocation8 + $0x30] sm:$0xf]
    %v2572 = vld [vmem:[#allocation8 + $0x34] sm:$0xf]
    %v2573 = vld [vmem:[#allocation8 + $0x38] sm:$0xf]
    %v2574 = vld [vmem:[#allocation8 + $0x3c] sm:$0xf]
    %v2575 = vld [vmem:[%s6] sm:$0x1]
    %v2577 = vlaneseq
    %v2578 = vshrl.u32 %v2577, 7
    %v2579 = vsub.s32 0, %v2578
    %v2580 = vrot.slane %v2575, %v2579
    %v2598 = vunpack.c.l.b16 %v2559
    %v2599 = vunpack.c.l.b16 %v2560
    %v2600 = vunpack.c.l.b16 %v2561
    %v2601 = vunpack.c.l.b16 %v2562
    %v2602 = vunpack.c.l.b16 %v2563
    %v2603 = vunpack.c.l.b16 %v2564
    %v2604 = vunpack.c.l.b16 %v2565
    %v2605 = vunpack.c.l.b16 %v2566
    %v2606 = vunpack.c.l.b16 %v2567
    %v2607 = vunpack.c.l.b16 %v2568
    %v2608 = vunpack.c.l.b16 %v2569
    %v2609 = vunpack.c.l.b16 %v2570
    %v2610 = vunpack.c.l.b16 %v2571
    %v2611 = vunpack.c.l.b16 %v2572
    %v2612 = vunpack.c.l.b16 %v2573
    %v2613 = vunpack.c.l.b16 %v2574
    %v2614 = vpack.c.b16 %v2599, %v2598
    %v2615 = vpack.c.b16 %v2601, %v2600
    %v2616 = vpack.c.b16 %v2603, %v2602
    %v2617 = vpack.c.b16 %v2605, %v2604
    %v2618 = vpack.c.b16 %v2607, %v2606
    %v2619 = vpack.c.b16 %v2609, %v2608
    %v2620 = vpack.c.b16 %v2611, %v2610
    %v2621 = vpack.c.b16 %v2613, %v2612
    %2630 = vmatprep.subr.bf16.mxu0 0
    %2631 = vmatpush1.bf16.msra.mxu0 %v2614
    %2632 = vmatprep.subr.bf16.mxu0 0
    %2633 = vmatpush1.bf16.msra.mxu0 %v2615
    %2634 = vmatprep.subr.bf16.mxu0 0
    %2635 = vmatpush1.bf16.msra.mxu0 %v2616
    %2636 = vmatprep.subr.bf16.mxu0 0
    %2637 = vmatpush1.bf16.msra.mxu0 %v2617
    %2638 = vmatprep.subr.bf16.mxu0 0
    %2639 = vmatpush1.bf16.msra.mxu0 %v2618
    %2640 = vmatprep.subr.bf16.mxu0 0
    %2641 = vmatpush1.bf16.msra.mxu0 %v2619
    %2642 = vmatprep.subr.bf16.mxu0 0
    %2643 = vmatpush1.bf16.msra.mxu0 %v2620
    %2644 = vmatprep.subr.bf16.mxu0 0
    %2645 = vmatpush1.bf16.msra.mxu0 %v2621
    %2646 = vmatprep.subr.bf16.mxu0 0
    %2647 = vmatpush1.bf16.msra.mxu0 0
    %2648 = vmatprep.subr.bf16.mxu0 0
    %2649 = vmatpush1.bf16.msra.mxu0 0
    %2650 = vmatprep.subr.bf16.mxu0 0
    %2651 = vmatpush1.bf16.msra.mxu0 0
    %2652 = vmatprep.subr.bf16.mxu0 0
    %2653 = vmatpush1.bf16.msra.mxu0 0
    %2654 = vmatprep.subr.bf16.mxu0 0
    %2655 = vmatpush1.bf16.msra.mxu0 0
    %2656 = vmatprep.subr.bf16.mxu0 0
    %2657 = vmatpush1.bf16.msra.mxu0 0
    %2658 = vmatprep.subr.bf16.mxu0 0
    %2659 = vmatpush1.bf16.msra.mxu0 0
    %2660 = vmatprep.subr.bf16.mxu0 0
    %2661 = vmatpush1.bf16.msra.mxu0 0
    %2662 = vmatprep.mubr.bf16.mxu0 0
    %2663 = vmatmul.mubr.bf16.gmra.mrb[0].mxu0 %v2558
    %v2664 = vpop.f32.mrb[0].mxu0
    %v2665 = vadd.f32 %v2580, %v2664
    %v2666 = vpop.f32.mrb[0].mxu0
    %v2667 = vpop.f32.mrb[0].mxu0
    %v2668 = vadd.f32 %v2580, %v2667
    %v2669 = vpop.f32.mrb[0].mxu0
    %2670 = vdwg.mxu0
    %2671 = vst [vmem:[#allocation10] sm:$0xff] %v2665
    %2672 = vst [vmem:[#allocation10 + $0x8] sm:$0xff] %v2668
    // Predicated region
    $region46: #{tpu_custom_call.1} parent=1 // pred_check
      _
    $region47: #{tpu_custom_call.1} parent=1 // pred_check_branch
      %2674 = sbr.rel (0) target = $region49
    $region48: #{tpu_custom_call.1} parent=1 // pred_region
      %s2676 = ssub.s32 256, 256
      %2677 = vsyncadd [#allocation4], %s2676
      %s2678 = sshll.u32 [#allocation10], 4
      %s2679 = int_to_ptr.vmem [resolvable:$true] %s2678
      %2684 = dma.vmem_to_hbm [thread:$0]  %s2679, 256, %s7, [#allocation4], 128, 128, 8
    $region49: #{tpu_custom_call.1} parent=1 // pred_fallthru
      _
    // Predicated region
    $region50: #{tpu_custom_call.1} parent=1 // pred_check
      _
    $region51: #{tpu_custom_call.1} parent=1 // pred_check_branch
      %2686 = sbr.rel (0) target = $region53
    $region52: #{tpu_custom_call.1} parent=1 // pred_region
      %2687 = dma.done [#allocation4], 256
    $region53: #{tpu_custom_call.1} parent=1 // pred_fallthru
      _
    %2688 = vsyncpa [#allocation3], 1
    %2689 = vsyncpa [#allocation6], 1
    %2690 = vsyncpa [#allocation9], 1
    %2691 = vsyncpa [#allocation4], 1

</llo_original>
